<compile_context>
chip_gen: v6e
topology: v6e:2x2x1
jax: 0.10.0
libtpu: 0.0.40
codegen_flags: <defaults>
</compile_context>

<pallas_src>
import functools

import jax
import jax.numpy as jnp
import numpy as np
from jax import lax
from jax.experimental import pallas as pl
from jax.experimental.pallas import tpu as pltpu


# ----------------------------------------------------------------------------
# Single fused kernel: whole batch, all heads, both projections.
# ----------------------------------------------------------------------------
def _mha_fused_kernel(xq_ref, xkv_ref, bias_ref,
                      wq_ref, bq_ref, wk_ref, bk_ref, wv_ref, bv_ref,
                      wo_ref, bo_ref, o_ref, oh_ref,
                      *, num_heads, batch, n_q, n_kv):
    # --- q/k/v projections on batch-flattened slabs (one dot each). ---------
    # dp_scale is pre-folded into wq/bq by the caller.
    q = jnp.dot(xq_ref[...], wq_ref[...],
                preferred_element_type=jnp.float32) + bq_ref[...]   # (B*N, Cqk)
    k = jnp.dot(xkv_ref[...], wk_ref[...],
                preferred_element_type=jnp.float32) + bk_ref[...]   # (B*L, Cqk)
    v = jnp.dot(xkv_ref[...], wv_ref[...],
                preferred_element_type=jnp.float32) + bv_ref[...]   # (B*L, Cv)
    bias = bias_ref[...]                                            # (B, L) additive mask bias

    cqk = q.shape[1] // num_heads
    cv = v.shape[1] // num_heads

    # --- per-(batch, head) scaled-dot-product attention ----------------------
    # Static (unrolled) loops; all slices are static sublane/lane slices.
    for b in range(batch):
        qb = q[b * n_q:(b + 1) * n_q, :]        # (N, Cqk)
        kb = k[b * n_kv:(b + 1) * n_kv, :]      # (L, Cqk)
        vb = v[b * n_kv:(b + 1) * n_kv, :]      # (L, Cv)
        bias_b = bias[b:b + 1, :]               # (1, L) broadcast over queries

        for h in range(num_heads):
            # scores = q_h @ k_h^T (contract channel dims; no explicit transpose)
            s = lax.dot_general(qb[:, h * cqk:(h + 1) * cqk],
                                kb[:, h * cqk:(h + 1) * cqk],
                                (((1,), (1,)), ((), ())),
                                preferred_element_type=jnp.float32)  # (N, L)
            s = s + bias_b                      # padding tokens get ~ -finfo.max

            # Softmax (exact division; fully-masked rows degrade to uniform,
            # matching the -finfo.max-fill reference behavior).
            s_max = jnp.max(s, axis=-1, keepdims=True)
            p = jnp.exp(s - s_max)
            attn = p / jnp.sum(p, axis=-1, keepdims=True)
            # TODO(synk): attention dropout omitted (module default p=0.0 / eval mode)

            # Heads land lane-contiguously in the scratch so one matmul can do
            # the whole output projection afterwards.
            oh_ref[b * n_q:(b + 1) * n_q, h * cv:(h + 1) * cv] = jnp.dot(
                attn, vb[:, h * cv:(h + 1) * cv],
                preferred_element_type=jnp.float32)                 # (N, cv)

    # --- merged output projection: one (B*N, Cv) @ (Cv, Dout) matmul --------
    out = jnp.dot(oh_ref[...], wo_ref[...],
                  preferred_element_type=jnp.float32) + bo_ref[...]
    o_ref[...] = out.astype(o_ref.dtype)


# ----------------------------------------------------------------------------
# Module wrapper
# ----------------------------------------------------------------------------
class MultiHeadAttentionPallas:
    def __init__(
        self,
        num_heads,
        num_q_input_channels,
        num_kv_input_channels,
        num_qk_channels=None,
        num_v_channels=None,
        num_output_channels=None,
        key=None,
    ):
        if num_qk_channels is None:
            num_qk_channels = num_q_input_channels
        if num_v_channels is None:
            num_v_channels = num_qk_channels
        if num_output_channels is None:
            num_output_channels = num_q_input_channels
        assert num_qk_channels % num_heads == 0
        assert num_v_channels % num_heads == 0

        self.num_heads = num_heads
        self.dp_scale = (num_qk_channels // num_heads) ** (-0.5)

        if key is None:
            key = jax.random.PRNGKey(0)
        keys = jax.random.split(key, 8)

        def init_linear(kw, kb, fan_in, fan_out):
            # deterministic init (PyTorch-Linear-like uniform bounds)
            bound = 1.0 / np.sqrt(fan_in)
            w = jax.random.uniform(kw, (fan_in, fan_out), jnp.float32, -bound, bound)
            b = jax.random.uniform(kb, (1, fan_out), jnp.float32, -bound, bound)
            return w, b

        self.wq, self.bq = init_linear(keys[0], keys[1], num_q_input_channels, num_qk_channels)
        self.wk, self.bk = init_linear(keys[2], keys[3], num_kv_input_channels, num_qk_channels)
        self.wv, self.bv = init_linear(keys[4], keys[5], num_kv_input_channels, num_v_channels)
        self.wo, self.bo = init_linear(keys[6], keys[7], num_v_channels, num_output_channels)

        # Fold the softmax scale into the query projection once, at init.
        self.wq_s = self.wq * self.dp_scale
        self.bq_s = self.bq * self.dp_scale

    def __call__(self, x_q, x_kv, pad_mask=None):
        B, N, Dq = x_q.shape
        _, L, Dkv = x_kv.shape
        Cv = self.wv.shape[1]
        Dout = self.wo.shape[1]

        # Precompute additive mask bias in the wrapper (review suggestion):
        # masked key positions contribute -finfo.max, unmasked contribute 0.
        neg = -jnp.finfo(jnp.float32).max
        if pad_mask is None:
            bias = jnp.zeros((B, L), jnp.float32)
        else:
            bias = pad_mask.astype(jnp.float32).reshape(B, L) * neg

        # Batch-flattened slabs for the projections (free reshapes in XLA).
        xq_flat = x_q.reshape(B * N, Dq)
        xkv_flat = x_kv.reshape(B * L, Dkv)

        kernel = functools.partial(
            _mha_fused_kernel,
            num_heads=self.num_heads, batch=B, n_q=N, n_kv=L,
        )

        vmem_spec = pl.BlockSpec(memory_space=pltpu.MemorySpace.VMEM)
        out_flat = pl.pallas_call(
            kernel,
            out_shape=jax.ShapeDtypeStruct((B * N, Dout), x_q.dtype),
            in_specs=[vmem_spec] * 11,
            out_specs=vmem_spec,
            scratch_shapes=[pltpu.VMEM((B * N, Cv), jnp.float32)],
        )(xq_flat, xkv_flat, bias,
          self.wq_s, self.bq_s, self.wk, self.bk, self.wv, self.bv,
          self.wo, self.bo)

        return out_flat.reshape(B, N, Dout)


# ----------------------------------------------------------------------------
# Pure-JAX reference (same math, no Pallas) for a sanity check
# ----------------------------------------------------------------------------
def reference_forward(mha, x_q, x_kv, pad_mask):
    B, N, _ = x_q.shape
    H = mha.num_heads
    q = x_q @ mha.wq + mha.bq
    k = x_kv @ mha.wk + mha.bk
    v = x_kv @ mha.wv + mha.bv
    split = lambda x: x.reshape(B, -1, H, x.shape[-1] // H).transpose(0, 2, 1, 3)
    q, k, v = split(q), split(k), split(v)
    q = q * mha.dp_scale
    attn = jnp.einsum("bhic,bhjc->bhij", q, k)
    neg = -jnp.finfo(attn.dtype).max
    if pad_mask is not None:
        attn = jnp.where(pad_mask[:, None, None, :], neg, attn)
    attn = jax.nn.softmax(attn, axis=-1)
    o = jnp.einsum("bhij,bhjc->bhic", attn, v)
    o = o.transpose(0, 2, 1, 3).reshape(B, N, -1)
    return o @ mha.wo + mha.bo


if __name__ == "__main__":
    key = jax.random.PRNGKey(0)
    k_q, k_kv, k_params = jax.random.split(key, 3)

    B, N, L = 2, 8, 10
    D_Q, D_KV, HEADS = 32, 32, 4

    x_q = jax.random.normal(k_q, (B, N, D_Q), jnp.float32)
    x_kv = jax.random.normal(k_kv, (B, L, D_KV), jnp.float32)
    # boolean pad mask: True = padding token (mask out last 3 kv tokens of batch 1)
    pad_mask = jnp.zeros((B, L), bool).at[1, -3:].set(True)

    mha = MultiHeadAttentionPallas(
        num_heads=HEADS,
        num_q_input_channels=D_Q,
        num_kv_input_channels=D_KV,
        key=k_params,
    )

    out = mha(x_q, x_kv, pad_mask)
    out = jax.block_until_ready(out)

    ref = reference_forward(mha, x_q, x_kv, pad_mask)
    assert out.shape == (B, N, D_Q)
    np.testing.assert_allclose(np.asarray(out), np.asarray(ref), rtol=2e-3, atol=2e-3)

    print("KERNEL_OK")
</pallas_src>

<mosaic_0001>
module attributes {stable_mosaic.version = 11 : i64} {
  func.func @_mha_fused_kernel(%arg0: memref<16x32xf32, #tpu.memory_space<vmem>>, %arg1: memref<20x32xf32, #tpu.memory_space<vmem>>, %arg2: memref<2x10xf32, #tpu.memory_space<vmem>>, %arg3: memref<32x32xf32, #tpu.memory_space<vmem>>, %arg4: memref<1x32xf32, #tpu.memory_space<vmem>>, %arg5: memref<32x32xf32, #tpu.memory_space<vmem>>, %arg6: memref<1x32xf32, #tpu.memory_space<vmem>>, %arg7: memref<32x32xf32, #tpu.memory_space<vmem>>, %arg8: memref<1x32xf32, #tpu.memory_space<vmem>>, %arg9: memref<32x32xf32, #tpu.memory_space<vmem>>, %arg10: memref<1x32xf32, #tpu.memory_space<vmem>>, %arg11: memref<16x32xf32, #tpu.memory_space<vmem>>, %arg12: memref<16x32xf32, #tpu.memory_space<vmem>>) attributes {dimension_semantics = [], scalar_prefetch = 0 : i64, scratch_operands = 1 : i64, tpu.core_type = #tpu.core_type<tc>} {
    %c0 = arith.constant 0 : index
    %c0_0 = arith.constant 0 : index
    %0 = vector.load %arg0[%c0, %c0_0] : memref<16x32xf32, #tpu.memory_space<vmem>>, vector<16x32xf32>
    %c0_1 = arith.constant 0 : index
    %c0_2 = arith.constant 0 : index
    %1 = vector.load %arg3[%c0_1, %c0_2] : memref<32x32xf32, #tpu.memory_space<vmem>>, vector<32x32xf32>
    %cst = arith.constant dense<0.000000e+00> : vector<16x32xf32>
    %2 = tpu.matmul %0, %1, %cst {dimension_numbers = #tpu.dot_dimension_numbers<[1], [0], [0], [1], [0, 0, 1, 1], [], []>} : vector<16x32xf32>, vector<32x32xf32>, vector<16x32xf32> -> vector<16x32xf32>
    %c0_3 = arith.constant 0 : index
    %c0_4 = arith.constant 0 : index
    %3 = vector.load %arg4[%c0_3, %c0_4] : memref<1x32xf32, #tpu.memory_space<vmem>>, vector<1x32xf32>
    %4 = vector.broadcast %3 : vector<1x32xf32> to vector<16x32xf32>
    %5 = arith.addf %2, %4 : vector<16x32xf32>
    %c0_5 = arith.constant 0 : index
    %c0_6 = arith.constant 0 : index
    %6 = vector.load %arg1[%c0_5, %c0_6] : memref<20x32xf32, #tpu.memory_space<vmem>>, vector<20x32xf32>
    %c0_7 = arith.constant 0 : index
    %c0_8 = arith.constant 0 : index
    %7 = vector.load %arg5[%c0_7, %c0_8] : memref<32x32xf32, #tpu.memory_space<vmem>>, vector<32x32xf32>
    %cst_9 = arith.constant dense<0.000000e+00> : vector<20x32xf32>
    %8 = tpu.matmul %6, %7, %cst_9 {dimension_numbers = #tpu.dot_dimension_numbers<[1], [0], [0], [1], [0, 0, 1, 1], [], []>} : vector<20x32xf32>, vector<32x32xf32>, vector<20x32xf32> -> vector<20x32xf32>
    %c0_10 = arith.constant 0 : index
    %c0_11 = arith.constant 0 : index
    %9 = vector.load %arg6[%c0_10, %c0_11] : memref<1x32xf32, #tpu.memory_space<vmem>>, vector<1x32xf32>
    %10 = vector.broadcast %9 : vector<1x32xf32> to vector<20x32xf32>
    %11 = arith.addf %8, %10 : vector<20x32xf32>
    %c0_12 = arith.constant 0 : index
    %c0_13 = arith.constant 0 : index
    %12 = vector.load %arg1[%c0_12, %c0_13] : memref<20x32xf32, #tpu.memory_space<vmem>>, vector<20x32xf32>
    %c0_14 = arith.constant 0 : index
    %c0_15 = arith.constant 0 : index
    %13 = vector.load %arg7[%c0_14, %c0_15] : memref<32x32xf32, #tpu.memory_space<vmem>>, vector<32x32xf32>
    %cst_16 = arith.constant dense<0.000000e+00> : vector<20x32xf32>
    %14 = tpu.matmul %12, %13, %cst_16 {dimension_numbers = #tpu.dot_dimension_numbers<[1], [0], [0], [1], [0, 0, 1, 1], [], []>} : vector<20x32xf32>, vector<32x32xf32>, vector<20x32xf32> -> vector<20x32xf32>
    %c0_17 = arith.constant 0 : index
    %c0_18 = arith.constant 0 : index
    %15 = vector.load %arg8[%c0_17, %c0_18] : memref<1x32xf32, #tpu.memory_space<vmem>>, vector<1x32xf32>
    %16 = vector.broadcast %15 : vector<1x32xf32> to vector<20x32xf32>
    %17 = arith.addf %14, %16 : vector<20x32xf32>
    %c0_19 = arith.constant 0 : index
    %c0_20 = arith.constant 0 : index
    %18 = vector.load %arg2[%c0_19, %c0_20] : memref<2x10xf32, #tpu.memory_space<vmem>>, vector<2x10xf32>
    %19 = vector.extract_strided_slice %5 {offsets = [0, 0], sizes = [8, 32], strides = [1, 1]} : vector<16x32xf32> to vector<8x32xf32>
    %20 = vector.extract_strided_slice %11 {offsets = [0, 0], sizes = [10, 32], strides = [1, 1]} : vector<20x32xf32> to vector<10x32xf32>
    %21 = vector.extract_strided_slice %17 {offsets = [0, 0], sizes = [10, 32], strides = [1, 1]} : vector<20x32xf32> to vector<10x32xf32>
    %22 = vector.extract_strided_slice %18 {offsets = [0, 0], sizes = [1, 10], strides = [1, 1]} : vector<2x10xf32> to vector<1x10xf32>
    %23 = vector.extract_strided_slice %19 {offsets = [0, 0], sizes = [8, 8], strides = [1, 1]} : vector<8x32xf32> to vector<8x8xf32>
    %24 = vector.extract_strided_slice %20 {offsets = [0, 0], sizes = [10, 8], strides = [1, 1]} : vector<10x32xf32> to vector<10x8xf32>
    %cst_21 = arith.constant dense<0.000000e+00> : vector<8x10xf32>
    %25 = tpu.matmul %23, %24, %cst_21 {dimension_numbers = #tpu.dot_dimension_numbers<[1], [1], [0], [0], [0, 0, 1, 0], [], []>} : vector<8x8xf32>, vector<10x8xf32>, vector<8x10xf32> -> vector<8x10xf32>
    %26 = vector.broadcast %22 : vector<1x10xf32> to vector<8x10xf32>
    %27 = arith.addf %25, %26 : vector<8x10xf32>
    %cst_22 = arith.constant dense<0xFF800000> : vector<8xf32>
    %28 = vector.multi_reduction <maximumf>, %27, %cst_22 [1] : vector<8x10xf32> to vector<8xf32>
    %29 = vector.shape_cast %28 : vector<8xf32> to vector<8x1xf32>
    %30 = vector.broadcast %29 : vector<8x1xf32> to vector<8x10xf32>
    %31 = arith.subf %27, %30 : vector<8x10xf32>
    %32 = math.exp %31 : vector<8x10xf32>
    %cst_23 = arith.constant dense<0.000000e+00> : vector<8xf32>
    %33 = vector.multi_reduction <add>, %32, %cst_23 [1] : vector<8x10xf32> to vector<8xf32>
    %34 = vector.shape_cast %33 : vector<8xf32> to vector<8x1xf32>
    %35 = vector.broadcast %34 : vector<8x1xf32> to vector<8x10xf32>
    %36 = arith.divf %32, %35 : vector<8x10xf32>
    %37 = vector.extract_strided_slice %21 {offsets = [0, 0], sizes = [10, 8], strides = [1, 1]} : vector<10x32xf32> to vector<10x8xf32>
    %cst_24 = arith.constant dense<0.000000e+00> : vector<8x8xf32>
    %38 = tpu.matmul %36, %37, %cst_24 {dimension_numbers = #tpu.dot_dimension_numbers<[1], [0], [0], [1], [0, 0, 1, 1], [], []>} : vector<8x10xf32>, vector<10x8xf32>, vector<8x8xf32> -> vector<8x8xf32>
    %c0_25 = arith.constant 0 : index
    %c0_26 = arith.constant 0 : index
    %39 = vector.load %arg12[%c0_25, %c0_26] : memref<16x32xf32, #tpu.memory_space<vmem>>, vector<8x8xf32>
    tpu.vector_store %arg12[%c0_25, %c0_26], %38 {strides = array<i32>} : memref<16x32xf32, #tpu.memory_space<vmem>>, vector<8x8xf32>,
    %40 = vector.extract_strided_slice %19 {offsets = [0, 8], sizes = [8, 8], strides = [1, 1]} : vector<8x32xf32> to vector<8x8xf32>
    %41 = vector.extract_strided_slice %20 {offsets = [0, 8], sizes = [10, 8], strides = [1, 1]} : vector<10x32xf32> to vector<10x8xf32>
    %cst_27 = arith.constant dense<0.000000e+00> : vector<8x10xf32>
    %42 = tpu.matmul %40, %41, %cst_27 {dimension_numbers = #tpu.dot_dimension_numbers<[1], [1], [0], [0], [0, 0, 1, 0], [], []>} : vector<8x8xf32>, vector<10x8xf32>, vector<8x10xf32> -> vector<8x10xf32>
    %43 = vector.broadcast %22 : vector<1x10xf32> to vector<8x10xf32>
    %44 = arith.addf %42, %43 : vector<8x10xf32>
    %cst_28 = arith.constant dense<0xFF800000> : vector<8xf32>
    %45 = vector.multi_reduction <maximumf>, %44, %cst_28 [1] : vector<8x10xf32> to vector<8xf32>
    %46 = vector.shape_cast %45 : vector<8xf32> to vector<8x1xf32>
    %47 = vector.broadcast %46 : vector<8x1xf32> to vector<8x10xf32>
    %48 = arith.subf %44, %47 : vector<8x10xf32>
    %49 = math.exp %48 : vector<8x10xf32>
    %cst_29 = arith.constant dense<0.000000e+00> : vector<8xf32>
    %50 = vector.multi_reduction <add>, %49, %cst_29 [1] : vector<8x10xf32> to vector<8xf32>
    %51 = vector.shape_cast %50 : vector<8xf32> to vector<8x1xf32>
    %52 = vector.broadcast %51 : vector<8x1xf32> to vector<8x10xf32>
    %53 = arith.divf %49, %52 : vector<8x10xf32>
    %54 = vector.extract_strided_slice %21 {offsets = [0, 8], sizes = [10, 8], strides = [1, 1]} : vector<10x32xf32> to vector<10x8xf32>
    %cst_30 = arith.constant dense<0.000000e+00> : vector<8x8xf32>
    %55 = tpu.matmul %53, %54, %cst_30 {dimension_numbers = #tpu.dot_dimension_numbers<[1], [0], [0], [1], [0, 0, 1, 1], [], []>} : vector<8x10xf32>, vector<10x8xf32>, vector<8x8xf32> -> vector<8x8xf32>
    %c0_31 = arith.constant 0 : index
    %c8 = arith.constant 8 : index
    %56 = vector.load %arg12[%c0_31, %c8] : memref<16x32xf32, #tpu.memory_space<vmem>>, vector<8x8xf32>
    tpu.vector_store %arg12[%c0_31, %c8], %55 {strides = array<i32>} : memref<16x32xf32, #tpu.memory_space<vmem>>, vector<8x8xf32>,
    %57 = vector.extract_strided_slice %19 {offsets = [0, 16], sizes = [8, 8], strides = [1, 1]} : vector<8x32xf32> to vector<8x8xf32>
    %58 = vector.extract_strided_slice %20 {offsets = [0, 16], sizes = [10, 8], strides = [1, 1]} : vector<10x32xf32> to vector<10x8xf32>
    %cst_32 = arith.constant dense<0.000000e+00> : vector<8x10xf32>
    %59 = tpu.matmul %57, %58, %cst_32 {dimension_numbers = #tpu.dot_dimension_numbers<[1], [1], [0], [0], [0, 0, 1, 0], [], []>} : vector<8x8xf32>, vector<10x8xf32>, vector<8x10xf32> -> vector<8x10xf32>
    %60 = vector.broadcast %22 : vector<1x10xf32> to vector<8x10xf32>
    %61 = arith.addf %59, %60 : vector<8x10xf32>
    %cst_33 = arith.constant dense<0xFF800000> : vector<8xf32>
    %62 = vector.multi_reduction <maximumf>, %61, %cst_33 [1] : vector<8x10xf32> to vector<8xf32>
    %63 = vector.shape_cast %62 : vector<8xf32> to vector<8x1xf32>
    %64 = vector.broadcast %63 : vector<8x1xf32> to vector<8x10xf32>
    %65 = arith.subf %61, %64 : vector<8x10xf32>
    %66 = math.exp %65 : vector<8x10xf32>
    %cst_34 = arith.constant dense<0.000000e+00> : vector<8xf32>
    %67 = vector.multi_reduction <add>, %66, %cst_34 [1] : vector<8x10xf32> to vector<8xf32>
    %68 = vector.shape_cast %67 : vector<8xf32> to vector<8x1xf32>
    %69 = vector.broadcast %68 : vector<8x1xf32> to vector<8x10xf32>
    %70 = arith.divf %66, %69 : vector<8x10xf32>
    %71 = vector.extract_strided_slice %21 {offsets = [0, 16], sizes = [10, 8], strides = [1, 1]} : vector<10x32xf32> to vector<10x8xf32>
    %cst_35 = arith.constant dense<0.000000e+00> : vector<8x8xf32>
    %72 = tpu.matmul %70, %71, %cst_35 {dimension_numbers = #tpu.dot_dimension_numbers<[1], [0], [0], [1], [0, 0, 1, 1], [], []>} : vector<8x10xf32>, vector<10x8xf32>, vector<8x8xf32> -> vector<8x8xf32>
    %c0_36 = arith.constant 0 : index
    %c16 = arith.constant 16 : index
    %73 = vector.load %arg12[%c0_36, %c16] : memref<16x32xf32, #tpu.memory_space<vmem>>, vector<8x8xf32>
    tpu.vector_store %arg12[%c0_36, %c16], %72 {strides = array<i32>} : memref<16x32xf32, #tpu.memory_space<vmem>>, vector<8x8xf32>,
    %74 = vector.extract_strided_slice %19 {offsets = [0, 24], sizes = [8, 8], strides = [1, 1]} : vector<8x32xf32> to vector<8x8xf32>
    %75 = vector.extract_strided_slice %20 {offsets = [0, 24], sizes = [10, 8], strides = [1, 1]} : vector<10x32xf32> to vector<10x8xf32>
    %cst_37 = arith.constant dense<0.000000e+00> : vector<8x10xf32>
    %76 = tpu.matmul %74, %75, %cst_37 {dimension_numbers = #tpu.dot_dimension_numbers<[1], [1], [0], [0], [0, 0, 1, 0], [], []>} : vector<8x8xf32>, vector<10x8xf32>, vector<8x10xf32> -> vector<8x10xf32>
    %77 = vector.broadcast %22 : vector<1x10xf32> to vector<8x10xf32>
    %78 = arith.addf %76, %77 : vector<8x10xf32>
    %cst_38 = arith.constant dense<0xFF800000> : vector<8xf32>
    %79 = vector.multi_reduction <maximumf>, %78, %cst_38 [1] : vector<8x10xf32> to vector<8xf32>
    %80 = vector.shape_cast %79 : vector<8xf32> to vector<8x1xf32>
    %81 = vector.broadcast %80 : vector<8x1xf32> to vector<8x10xf32>
    %82 = arith.subf %78, %81 : vector<8x10xf32>
    %83 = math.exp %82 : vector<8x10xf32>
    %cst_39 = arith.constant dense<0.000000e+00> : vector<8xf32>
    %84 = vector.multi_reduction <add>, %83, %cst_39 [1] : vector<8x10xf32> to vector<8xf32>
    %85 = vector.shape_cast %84 : vector<8xf32> to vector<8x1xf32>
    %86 = vector.broadcast %85 : vector<8x1xf32> to vector<8x10xf32>
    %87 = arith.divf %83, %86 : vector<8x10xf32>
    %88 = vector.extract_strided_slice %21 {offsets = [0, 24], sizes = [10, 8], strides = [1, 1]} : vector<10x32xf32> to vector<10x8xf32>
    %cst_40 = arith.constant dense<0.000000e+00> : vector<8x8xf32>
    %89 = tpu.matmul %87, %88, %cst_40 {dimension_numbers = #tpu.dot_dimension_numbers<[1], [0], [0], [1], [0, 0, 1, 1], [], []>} : vector<8x10xf32>, vector<10x8xf32>, vector<8x8xf32> -> vector<8x8xf32>
    %c0_41 = arith.constant 0 : index
    %c24 = arith.constant 24 : index
    %90 = vector.load %arg12[%c0_41, %c24] : memref<16x32xf32, #tpu.memory_space<vmem>>, vector<8x8xf32>
    tpu.vector_store %arg12[%c0_41, %c24], %89 {strides = array<i32>} : memref<16x32xf32, #tpu.memory_space<vmem>>, vector<8x8xf32>,
    %91 = vector.extract_strided_slice %5 {offsets = [8, 0], sizes = [8, 32], strides = [1, 1]} : vector<16x32xf32> to vector<8x32xf32>
    %92 = vector.extract_strided_slice %11 {offsets = [10, 0], sizes = [10, 32], strides = [1, 1]} : vector<20x32xf32> to vector<10x32xf32>
    %93 = vector.extract_strided_slice %17 {offsets = [10, 0], sizes = [10, 32], strides = [1, 1]} : vector<20x32xf32> to vector<10x32xf32>
    %94 = vector.extract_strided_slice %18 {offsets = [1, 0], sizes = [1, 10], strides = [1, 1]} : vector<2x10xf32> to vector<1x10xf32>
    %95 = vector.extract_strided_slice %91 {offsets = [0, 0], sizes = [8, 8], strides = [1, 1]} : vector<8x32xf32> to vector<8x8xf32>
    %96 = vector.extract_strided_slice %92 {offsets = [0, 0], sizes = [10, 8], strides = [1, 1]} : vector<10x32xf32> to vector<10x8xf32>
    %cst_42 = arith.constant dense<0.000000e+00> : vector<8x10xf32>
    %97 = tpu.matmul %95, %96, %cst_42 {dimension_numbers = #tpu.dot_dimension_numbers<[1], [1], [0], [0], [0, 0, 1, 0], [], []>} : vector<8x8xf32>, vector<10x8xf32>, vector<8x10xf32> -> vector<8x10xf32>
    %98 = vector.broadcast %94 : vector<1x10xf32> to vector<8x10xf32>
    %99 = arith.addf %97, %98 : vector<8x10xf32>
    %cst_43 = arith.constant dense<0xFF800000> : vector<8xf32>
    %100 = vector.multi_reduction <maximumf>, %99, %cst_43 [1] : vector<8x10xf32> to vector<8xf32>
    %101 = vector.shape_cast %100 : vector<8xf32> to vector<8x1xf32>
    %102 = vector.broadcast %101 : vector<8x1xf32> to vector<8x10xf32>
    %103 = arith.subf %99, %102 : vector<8x10xf32>
    %104 = math.exp %103 : vector<8x10xf32>
    %cst_44 = arith.constant dense<0.000000e+00> : vector<8xf32>
    %105 = vector.multi_reduction <add>, %104, %cst_44 [1] : vector<8x10xf32> to vector<8xf32>
    %106 = vector.shape_cast %105 : vector<8xf32> to vector<8x1xf32>
    %107 = vector.broadcast %106 : vector<8x1xf32> to vector<8x10xf32>
    %108 = arith.divf %104, %107 : vector<8x10xf32>
    %109 = vector.extract_strided_slice %93 {offsets = [0, 0], sizes = [10, 8], strides = [1, 1]} : vector<10x32xf32> to vector<10x8xf32>
    %cst_45 = arith.constant dense<0.000000e+00> : vector<8x8xf32>
    %110 = tpu.matmul %108, %109, %cst_45 {dimension_numbers = #tpu.dot_dimension_numbers<[1], [0], [0], [1], [0, 0, 1, 1], [], []>} : vector<8x10xf32>, vector<10x8xf32>, vector<8x8xf32> -> vector<8x8xf32>
    %c8_46 = arith.constant 8 : index
    %c0_47 = arith.constant 0 : index
    %111 = vector.load %arg12[%c8_46, %c0_47] : memref<16x32xf32, #tpu.memory_space<vmem>>, vector<8x8xf32>
    tpu.vector_store %arg12[%c8_46, %c0_47], %110 {strides = array<i32>} : memref<16x32xf32, #tpu.memory_space<vmem>>, vector<8x8xf32>,
    %112 = vector.extract_strided_slice %91 {offsets = [0, 8], sizes = [8, 8], strides = [1, 1]} : vector<8x32xf32> to vector<8x8xf32>
    %113 = vector.extract_strided_slice %92 {offsets = [0, 8], sizes = [10, 8], strides = [1, 1]} : vector<10x32xf32> to vector<10x8xf32>
    %cst_48 = arith.constant dense<0.000000e+00> : vector<8x10xf32>
    %114 = tpu.matmul %112, %113, %cst_48 {dimension_numbers = #tpu.dot_dimension_numbers<[1], [1], [0], [0], [0, 0, 1, 0], [], []>} : vector<8x8xf32>, vector<10x8xf32>, vector<8x10xf32> -> vector<8x10xf32>
    %115 = vector.broadcast %94 : vector<1x10xf32> to vector<8x10xf32>
    %116 = arith.addf %114, %115 : vector<8x10xf32>
    %cst_49 = arith.constant dense<0xFF800000> : vector<8xf32>
    %117 = vector.multi_reduction <maximumf>, %116, %cst_49 [1] : vector<8x10xf32> to vector<8xf32>
    %118 = vector.shape_cast %117 : vector<8xf32> to vector<8x1xf32>
    %119 = vector.broadcast %118 : vector<8x1xf32> to vector<8x10xf32>
    %120 = arith.subf %116, %119 : vector<8x10xf32>
    %121 = math.exp %120 : vector<8x10xf32>
    %cst_50 = arith.constant dense<0.000000e+00> : vector<8xf32>
    %122 = vector.multi_reduction <add>, %121, %cst_50 [1] : vector<8x10xf32> to vector<8xf32>
    %123 = vector.shape_cast %122 : vector<8xf32> to vector<8x1xf32>
    %124 = vector.broadcast %123 : vector<8x1xf32> to vector<8x10xf32>
    %125 = arith.divf %121, %124 : vector<8x10xf32>
    %126 = vector.extract_strided_slice %93 {offsets = [0, 8], sizes = [10, 8], strides = [1, 1]} : vector<10x32xf32> to vector<10x8xf32>
    %cst_51 = arith.constant dense<0.000000e+00> : vector<8x8xf32>
    %127 = tpu.matmul %125, %126, %cst_51 {dimension_numbers = #tpu.dot_dimension_numbers<[1], [0], [0], [1], [0, 0, 1, 1], [], []>} : vector<8x10xf32>, vector<10x8xf32>, vector<8x8xf32> -> vector<8x8xf32>
    %c8_52 = arith.constant 8 : index
    %c8_53 = arith.constant 8 : index
    %128 = vector.load %arg12[%c8_52, %c8_53] : memref<16x32xf32, #tpu.memory_space<vmem>>, vector<8x8xf32>
    tpu.vector_store %arg12[%c8_52, %c8_53], %127 {strides = array<i32>} : memref<16x32xf32, #tpu.memory_space<vmem>>, vector<8x8xf32>,
    %129 = vector.extract_strided_slice %91 {offsets = [0, 16], sizes = [8, 8], strides = [1, 1]} : vector<8x32xf32> to vector<8x8xf32>
    %130 = vector.extract_strided_slice %92 {offsets = [0, 16], sizes = [10, 8], strides = [1, 1]} : vector<10x32xf32> to vector<10x8xf32>
    %cst_54 = arith.constant dense<0.000000e+00> : vector<8x10xf32>
    %131 = tpu.matmul %129, %130, %cst_54 {dimension_numbers = #tpu.dot_dimension_numbers<[1], [1], [0], [0], [0, 0, 1, 0], [], []>} : vector<8x8xf32>, vector<10x8xf32>, vector<8x10xf32> -> vector<8x10xf32>
    %132 = vector.broadcast %94 : vector<1x10xf32> to vector<8x10xf32>
    %133 = arith.addf %131, %132 : vector<8x10xf32>
    %cst_55 = arith.constant dense<0xFF800000> : vector<8xf32>
    %134 = vector.multi_reduction <maximumf>, %133, %cst_55 [1] : vector<8x10xf32> to vector<8xf32>
    %135 = vector.shape_cast %134 : vector<8xf32> to vector<8x1xf32>
    %136 = vector.broadcast %135 : vector<8x1xf32> to vector<8x10xf32>
    %137 = arith.subf %133, %136 : vector<8x10xf32>
    %138 = math.exp %137 : vector<8x10xf32>
    %cst_56 = arith.constant dense<0.000000e+00> : vector<8xf32>
    %139 = vector.multi_reduction <add>, %138, %cst_56 [1] : vector<8x10xf32> to vector<8xf32>
    %140 = vector.shape_cast %139 : vector<8xf32> to vector<8x1xf32>
    %141 = vector.broadcast %140 : vector<8x1xf32> to vector<8x10xf32>
    %142 = arith.divf %138, %141 : vector<8x10xf32>
    %143 = vector.extract_strided_slice %93 {offsets = [0, 16], sizes = [10, 8], strides = [1, 1]} : vector<10x32xf32> to vector<10x8xf32>
    %cst_57 = arith.constant dense<0.000000e+00> : vector<8x8xf32>
    %144 = tpu.matmul %142, %143, %cst_57 {dimension_numbers = #tpu.dot_dimension_numbers<[1], [0], [0], [1], [0, 0, 1, 1], [], []>} : vector<8x10xf32>, vector<10x8xf32>, vector<8x8xf32> -> vector<8x8xf32>
    %c8_58 = arith.constant 8 : index
    %c16_59 = arith.constant 16 : index
    %145 = vector.load %arg12[%c8_58, %c16_59] : memref<16x32xf32, #tpu.memory_space<vmem>>, vector<8x8xf32>
    tpu.vector_store %arg12[%c8_58, %c16_59], %144 {strides = array<i32>} : memref<16x32xf32, #tpu.memory_space<vmem>>, vector<8x8xf32>,
    %146 = vector.extract_strided_slice %91 {offsets = [0, 24], sizes = [8, 8], strides = [1, 1]} : vector<8x32xf32> to vector<8x8xf32>
    %147 = vector.extract_strided_slice %92 {offsets = [0, 24], sizes = [10, 8], strides = [1, 1]} : vector<10x32xf32> to vector<10x8xf32>
    %cst_60 = arith.constant dense<0.000000e+00> : vector<8x10xf32>
    %148 = tpu.matmul %146, %147, %cst_60 {dimension_numbers = #tpu.dot_dimension_numbers<[1], [1], [0], [0], [0, 0, 1, 0], [], []>} : vector<8x8xf32>, vector<10x8xf32>, vector<8x10xf32> -> vector<8x10xf32>
    %149 = vector.broadcast %94 : vector<1x10xf32> to vector<8x10xf32>
    %150 = arith.addf %148, %149 : vector<8x10xf32>
    %cst_61 = arith.constant dense<0xFF800000> : vector<8xf32>
    %151 = vector.multi_reduction <maximumf>, %150, %cst_61 [1] : vector<8x10xf32> to vector<8xf32>
    %152 = vector.shape_cast %151 : vector<8xf32> to vector<8x1xf32>
    %153 = vector.broadcast %152 : vector<8x1xf32> to vector<8x10xf32>
    %154 = arith.subf %150, %153 : vector<8x10xf32>
    %155 = math.exp %154 : vector<8x10xf32>
    %cst_62 = arith.constant dense<0.000000e+00> : vector<8xf32>
    %156 = vector.multi_reduction <add>, %155, %cst_62 [1] : vector<8x10xf32> to vector<8xf32>
    %157 = vector.shape_cast %156 : vector<8xf32> to vector<8x1xf32>
    %158 = vector.broadcast %157 : vector<8x1xf32> to vector<8x10xf32>
    %159 = arith.divf %155, %158 : vector<8x10xf32>
    %160 = vector.extract_strided_slice %93 {offsets = [0, 24], sizes = [10, 8], strides = [1, 1]} : vector<10x32xf32> to vector<10x8xf32>
    %cst_63 = arith.constant dense<0.000000e+00> : vector<8x8xf32>
    %161 = tpu.matmul %159, %160, %cst_63 {dimension_numbers = #tpu.dot_dimension_numbers<[1], [0], [0], [1], [0, 0, 1, 1], [], []>} : vector<8x10xf32>, vector<10x8xf32>, vector<8x8xf32> -> vector<8x8xf32>
    %c8_64 = arith.constant 8 : index
    %c24_65 = arith.constant 24 : index
    %162 = vector.load %arg12[%c8_64, %c24_65] : memref<16x32xf32, #tpu.memory_space<vmem>>, vector<8x8xf32>
    tpu.vector_store %arg12[%c8_64, %c24_65], %161 {strides = array<i32>} : memref<16x32xf32, #tpu.memory_space<vmem>>, vector<8x8xf32>,
    %c0_66 = arith.constant 0 : index
    %c0_67 = arith.constant 0 : index
    %163 = vector.load %arg12[%c0_66, %c0_67] : memref<16x32xf32, #tpu.memory_space<vmem>>, vector<16x32xf32>
    %c0_68 = arith.constant 0 : index
    %c0_69 = arith.constant 0 : index
    %164 = vector.load %arg9[%c0_68, %c0_69] : memref<32x32xf32, #tpu.memory_space<vmem>>, vector<32x32xf32>
    %cst_70 = arith.constant dense<0.000000e+00> : vector<16x32xf32>
    %165 = tpu.matmul %163, %164, %cst_70 {dimension_numbers = #tpu.dot_dimension_numbers<[1], [0], [0], [1], [0, 0, 1, 1], [], []>} : vector<16x32xf32>, vector<32x32xf32>, vector<16x32xf32> -> vector<16x32xf32>
    %c0_71 = arith.constant 0 : index
    %c0_72 = arith.constant 0 : index
    %166 = vector.load %arg10[%c0_71, %c0_72] : memref<1x32xf32, #tpu.memory_space<vmem>>, vector<1x32xf32>
    %167 = vector.broadcast %166 : vector<1x32xf32> to vector<16x32xf32>
    %168 = arith.addf %165, %167 : vector<16x32xf32>
    %c0_73 = arith.constant 0 : index
    %c0_74 = arith.constant 0 : index
    %169 = vector.load %arg11[%c0_73, %c0_74] : memref<16x32xf32, #tpu.memory_space<vmem>>, vector<16x32xf32>
    tpu.vector_store %arg11[%c0_73, %c0_74], %168 {strides = array<i32>} : memref<16x32xf32, #tpu.memory_space<vmem>>, vector<16x32xf32>,
    return
  }
}

</mosaic_0001>

<llo_original>
// kernel: tpu_custom_call.1
$region0: #{tpu_custom_call.1}
  #allocation0 [shape = 'u32[]', space=smem, size = 0x4, offset = 0x4, fixed_abs, tag = 'smem constant byte address 0x4 - core index']
  #allocation1 [shape = 'u32[144,128]{1,0:T(1,128)}', space=vmem, size = 0x12000, scoped, tag = 'internal scratch']
  #allocation2 [shape = 'f32[16,32]{1,0:T(8,128)}', space=vmem, size = 0x2000, scoped, tag = 'scratch operand']
  %s0 = inlined_call_operand.hbm [shape: f32[16,32], index: 0, kind: input, shape index: {}]
  %s1 = inlined_call_operand.hbm [shape: f32[20,32], index: 1, kind: input, shape index: {}]
  %s2 = inlined_call_operand.vmem [shape: f32[2,10], index: 2, kind: input, shape index: {}]
  %s3 = inlined_call_operand.hbm [shape: f32[32,32], index: 3, kind: input, shape index: {}]
  %s4 = inlined_call_operand.vmem [shape: f32[1,32], index: 4, kind: input, shape index: {}]
  %s5 = inlined_call_operand.hbm [shape: f32[32,32], index: 5, kind: input, shape index: {}]
  %s6 = inlined_call_operand.vmem [shape: f32[1,32], index: 6, kind: input, shape index: {}]
  %s7 = inlined_call_operand.hbm [shape: f32[32,32], index: 7, kind: input, shape index: {}]
  %s8 = inlined_call_operand.vmem [shape: f32[1,32], index: 8, kind: input, shape index: {}]
  %s9 = inlined_call_operand.hbm [shape: f32[32,32], index: 9, kind: input, shape index: {}]
  %s10 = inlined_call_operand.vmem [shape: f32[1,32], index: 10, kind: input, shape index: {}]
  %s11 = inlined_call_operand.hbm [shape: f32[16,32], index: 11, kind: output, shape index: {}]
  %s12 = sld [smem:[#allocation0]]
  $region78: #{tpu_custom_call.1} parent=0
    _
  %s14 = ssub.s32 1, %s12
  %s15 = scalar_select 0, %s14, %s12
  $region1: #{tpu_custom_call.1} parent=0
    #allocation3 [shape = 'u8[8192]{0}', space=vmem, size = 0x2000, scoped, tag = 'input window, operand 0, single buffered']
    #allocation4 [shape = 's32[1]{0}', space=sflag, size = 0x4, scoped, tag = 'scoped memory for tpu_custom_call.1']
    #allocation5 [shape = 's32[1]{0}', space=sflag, size = 0x4, scoped, tag = 'scoped memory for tpu_custom_call.1']
    #allocation6 [shape = 'u8[12288]{0}', space=vmem, size = 0x3000, scoped, tag = 'input window, operand 1, single buffered']
    #allocation7 [shape = 's32[1]{0}', space=sflag, size = 0x4, scoped, tag = 'scoped memory for tpu_custom_call.1']
    #allocation8 [shape = 'u8[16384]{0}', space=vmem, size = 0x4000, scoped, tag = 'input window, operand 3, single buffered']
    #allocation9 [shape = 'u8[16384]{0}', space=vmem, size = 0x4000, scoped, tag = 'input window, operand 5, single buffered']
    #allocation10 [shape = 's32[1]{0}', space=sflag, size = 0x4, scoped, tag = 'scoped memory for tpu_custom_call.1']
    #allocation11 [shape = 'u8[16384]{0}', space=vmem, size = 0x4000, scoped, tag = 'input window, operand 7, single buffered']
    #allocation12 [shape = 'u8[16384]{0}', space=vmem, size = 0x4000, scoped, tag = 'input window, operand 9, single buffered']
    #allocation13 [shape = 's32[1]{0}', space=sflag, size = 0x4, scoped, tag = 'scoped memory for tpu_custom_call.1']
    #allocation14 [shape = 'u8[8192]{0}', space=vmem, size = 0x2000, scoped, tag = 'output window, operand 0, single buffered']
    %16 = vsyncpa [#allocation4], 0
    %17 = vsyncpa [#allocation7], 0
    %18 = vsyncpa [#allocation10], 0
    %19 = vsyncpa [#allocation13], 0
    %20 = vsyncpa [#allocation5], 0
    // Predicated region
    $region2: #{tpu_custom_call.1} parent=1 // pred_check
      _
    $region3: #{tpu_custom_call.1} parent=1 // pred_check_branch
      %22 = sbr.rel (0) target = $region5
    $region4: #{tpu_custom_call.1} parent=1 // pred_region
      %s24 = ssub.s32 256, 256
      %25 = vsyncadd [#allocation4], %s24
      %s26 = sshll.u32 [#allocation3], 4
      %s27 = int_to_ptr.vmem [resolvable:$true] %s26
      %32 = dma.hbm_to_vmem [thread:$0]  %s0, 256, %s27, [#allocation4], 128, 128, 8
    $region5: #{tpu_custom_call.1} parent=1 // pred_fallthru
      _
    // Predicated region
    $region6: #{tpu_custom_call.1} parent=1 // pred_check
      _
    $region7: #{tpu_custom_call.1} parent=1 // pred_check_branch
      %34 = sbr.rel (0) target = $region9
    $region8: #{tpu_custom_call.1} parent=1 // pred_region
      %s36 = ssub.s32 384, 384
      %37 = vsyncadd [#allocation7], %s36
      %s38 = sshll.u32 [#allocation6], 4
      %s39 = int_to_ptr.vmem [resolvable:$true] %s38
      %44 = dma.hbm_to_vmem [thread:$0]  %s1, 384, %s39, [#allocation7], 128, 128, 8
    $region9: #{tpu_custom_call.1} parent=1 // pred_fallthru
      _
    // Predicated region
    $region10: #{tpu_custom_call.1} parent=1 // pred_check
      _
    $region11: #{tpu_custom_call.1} parent=1 // pred_check_branch
      %46 = sbr.rel (0) target = $region13
    $region12: #{tpu_custom_call.1} parent=1 // pred_region
      _
    $region13: #{tpu_custom_call.1} parent=1 // pred_fallthru
      _
    // Predicated region
    $region14: #{tpu_custom_call.1} parent=1 // pred_check
      _
    $region15: #{tpu_custom_call.1} parent=1 // pred_check_branch
      %48 = sbr.rel (0) target = $region17
    $region16: #{tpu_custom_call.1} parent=1 // pred_region
      %s50 = ssub.s32 512, 512
      %51 = vsyncadd [#allocation7], %s50
      %s52 = sshll.u32 [#allocation8], 4
      %s53 = int_to_ptr.vmem [resolvable:$true] %s52
      %58 = dma.hbm_to_vmem [thread:$0]  %s3, 512, %s53, [#allocation7], 128, 128, 8
    $region17: #{tpu_custom_call.1} parent=1 // pred_fallthru
      _
    // Predicated region
    $region18: #{tpu_custom_call.1} parent=1 // pred_check
      _
    $region19: #{tpu_custom_call.1} parent=1 // pred_check_branch
      %60 = sbr.rel (0) target = $region21
    $region20: #{tpu_custom_call.1} parent=1 // pred_region
      _
    $region21: #{tpu_custom_call.1} parent=1 // pred_fallthru
      _
    // Predicated region
    $region22: #{tpu_custom_call.1} parent=1 // pred_check
      _
    $region23: #{tpu_custom_call.1} parent=1 // pred_check_branch
      %62 = sbr.rel (0) target = $region25
    $region24: #{tpu_custom_call.1} parent=1 // pred_region
      %s64 = ssub.s32 512, 512
      %65 = vsyncadd [#allocation10], %s64
      %s66 = sshll.u32 [#allocation9], 4
      %s67 = int_to_ptr.vmem [resolvable:$true] %s66
      %72 = dma.hbm_to_vmem [thread:$0]  %s5, 512, %s67, [#allocation10], 128, 128, 8
    $region25: #{tpu_custom_call.1} parent=1 // pred_fallthru
      _
    // Predicated region
    $region26: #{tpu_custom_call.1} parent=1 // pred_check
      _
    $region27: #{tpu_custom_call.1} parent=1 // pred_check_branch
      %74 = sbr.rel (0) target = $region29
    $region28: #{tpu_custom_call.1} parent=1 // pred_region
      _
    $region29: #{tpu_custom_call.1} parent=1 // pred_fallthru
      _
    // Predicated region
    $region30: #{tpu_custom_call.1} parent=1 // pred_check
      _
    $region31: #{tpu_custom_call.1} parent=1 // pred_check_branch
      %76 = sbr.rel (0) target = $region33
    $region32: #{tpu_custom_call.1} parent=1 // pred_region
      %s78 = ssub.s32 512, 512
      %79 = vsyncadd [#allocation10], %s78
      %s80 = sshll.u32 [#allocation11], 4
      %s81 = int_to_ptr.vmem [resolvable:$true] %s80
      %86 = dma.hbm_to_vmem [thread:$0]  %s7, 512, %s81, [#allocation10], 128, 128, 8
    $region33: #{tpu_custom_call.1} parent=1 // pred_fallthru
      _
    // Predicated region
    $region34: #{tpu_custom_call.1} parent=1 // pred_check
      _
    $region35: #{tpu_custom_call.1} parent=1 // pred_check_branch
      %88 = sbr.rel (0) target = $region37
    $region36: #{tpu_custom_call.1} parent=1 // pred_region
      _
    $region37: #{tpu_custom_call.1} parent=1 // pred_fallthru
      _
    // Predicated region
    $region38: #{tpu_custom_call.1} parent=1 // pred_check
      _
    $region39: #{tpu_custom_call.1} parent=1 // pred_check_branch
      %90 = sbr.rel (0) target = $region41
    $region40: #{tpu_custom_call.1} parent=1 // pred_region
      %s92 = ssub.s32 512, 512
      %93 = vsyncadd [#allocation13], %s92
      %s94 = sshll.u32 [#allocation12], 4
      %s95 = int_to_ptr.vmem [resolvable:$true] %s94
      %100 = dma.hbm_to_vmem [thread:$0]  %s9, 512, %s95, [#allocation13], 128, 128, 8
    $region41: #{tpu_custom_call.1} parent=1 // pred_fallthru
      _
    // Predicated region
    $region42: #{tpu_custom_call.1} parent=1 // pred_check
      _
    $region43: #{tpu_custom_call.1} parent=1 // pred_check_branch
      %102 = sbr.rel (0) target = $region45
    $region44: #{tpu_custom_call.1} parent=1 // pred_region
      _
    $region45: #{tpu_custom_call.1} parent=1 // pred_fallthru
      _
    // Predicated region
    $region46: #{tpu_custom_call.1} parent=1 // pred_check
      _
    $region47: #{tpu_custom_call.1} parent=1 // pred_check_branch
      %104 = sbr.rel (0) target = $region49
    $region48: #{tpu_custom_call.1} parent=1 // pred_region
      %105 = dma.done [#allocation4], 256
    $region49: #{tpu_custom_call.1} parent=1 // pred_fallthru
      _
    // Predicated region
    $region50: #{tpu_custom_call.1} parent=1 // pred_check
      _
    $region51: #{tpu_custom_call.1} parent=1 // pred_check_branch
      %107 = sbr.rel (0) target = $region53
    $region52: #{tpu_custom_call.1} parent=1 // pred_region
      %108 = dma.done [#allocation7], 384
    $region53: #{tpu_custom_call.1} parent=1 // pred_fallthru
      _
    // Predicated region
    $region54: #{tpu_custom_call.1} parent=1 // pred_check
      _
    $region55: #{tpu_custom_call.1} parent=1 // pred_check_branch
      %110 = sbr.rel (0) target = $region57
    $region56: #{tpu_custom_call.1} parent=1 // pred_region
      %111 = dma.done [#allocation7], 512
    $region57: #{tpu_custom_call.1} parent=1 // pred_fallthru
      _
    // Predicated region
    $region58: #{tpu_custom_call.1} parent=1 // pred_check
      _
    $region59: #{tpu_custom_call.1} parent=1 // pred_check_branch
      %113 = sbr.rel (0) target = $region61
    $region60: #{tpu_custom_call.1} parent=1 // pred_region
      %114 = dma.done [#allocation10], 512
    $region61: #{tpu_custom_call.1} parent=1 // pred_fallthru
      _
    // Predicated region
    $region62: #{tpu_custom_call.1} parent=1 // pred_check
      _
    $region63: #{tpu_custom_call.1} parent=1 // pred_check_branch
      %116 = sbr.rel (0) target = $region65
    $region64: #{tpu_custom_call.1} parent=1 // pred_region
      %117 = dma.done [#allocation10], 512
    $region65: #{tpu_custom_call.1} parent=1 // pred_fallthru
      _
    // Predicated region
    $region66: #{tpu_custom_call.1} parent=1 // pred_check
      _
    $region67: #{tpu_custom_call.1} parent=1 // pred_check_branch
      %119 = sbr.rel (0) target = $region69
    $region68: #{tpu_custom_call.1} parent=1 // pred_region
      %120 = dma.done [#allocation13], 512
    $region69: #{tpu_custom_call.1} parent=1 // pred_fallthru
      _
    %v121 = vld [vmem:[#allocation3] sm:$0xff]
    %v122 = vld [vmem:[#allocation3 + $0x8] sm:$0xff]
    %v123 = vld [vmem:[#allocation8] sm:$0xff]
    %v124 = vld [vmem:[#allocation8 + $0x8] sm:$0xff]
    %v125 = vld [vmem:[#allocation8 + $0x10] sm:$0xff]
    %v126 = vld [vmem:[#allocation8 + $0x18] sm:$0xff]
    %v127 = vld [vmem:[%s4] sm:$0x1]
    %v129 = vlaneseq
    %v130 = vshrl.u32 %v129, 7
    %v131 = vsub.s32 0, %v130
    %v132 = vrot.slane %v127, %v131
    %vm134 = vcmask 261120
    %v136 = vsel %vm134, %v121, 0
    %v139 = vsel %vm134, %v122, 0
    %141 = vmatprep.subr.mxu0 0.0
    %142 = vmatpush1.msra.mxu0 0.0
    %143 = vmatprep.subr.mxu0 0.0
    %144 = vmatpush1.msra.mxu0 0.0
    %145 = vmatprep.subr.mxu0 0.0
    %146 = vmatpush1.msra.mxu0 0.0
    %147 = vmatprep.subr.mxu0 0.0
    %148 = vmatpush1.msra.mxu0 0.0
    %149 = vmatprep.subr.mxu0 0.0
    %150 = vmatpush1.msra.mxu0 0.0
    %151 = vmatprep.subr.mxu0 0.0
    %152 = vmatpush1.msra.mxu0 0.0
    %153 = vmatprep.subr.mxu0 0.0
    %154 = vmatpush1.msra.mxu0 0.0
    %155 = vmatprep.subr.mxu0 0.0
    %156 = vmatpush1.msra.mxu0 0.0
    %157 = vmatprep.subr.mxu0 0.0
    %158 = vmatpush1.msra.mxu0 0.0
    %159 = vmatprep.subr.mxu0 0.0
    %160 = vmatpush1.msra.mxu0 0.0
    %161 = vmatprep.subr.mxu0 0.0
    %162 = vmatpush1.msra.mxu0 0.0
    %163 = vmatprep.subr.mxu0 0.0
    %164 = vmatpush1.msra.mxu0 0.0
    %165 = vmatprep.subr.mxu0 0.0
    %166 = vmatpush1.msra.mxu0 %v126
    %167 = vmatprep.subr.mxu0 0.0
    %168 = vmatpush1.msra.mxu0 %v125
    %169 = vmatprep.subr.mxu0 0.0
    %170 = vmatpush1.msra.mxu0 %v124
    %171 = vmatprep.subr.mxu0 0.0
    %172 = vmatpush1.msra.mxu0 %v123
    %173 = vmatprep.subr.mxu0 0.0
    %174 = vmatpush2.msra.mxu0 0.0
    %175 = vmatprep.subr.mxu0 0.0
    %176 = vmatpush2.msra.mxu0 0.0
    %177 = vmatprep.subr.mxu0 0.0
    %178 = vmatpush2.msra.mxu0 0.0
    %179 = vmatprep.subr.mxu0 0.0
    %180 = vmatpush2.msra.mxu0 0.0
    %181 = vmatprep.subr.mxu0 0.0
    %182 = vmatpush2.msra.mxu0 0.0
    %183 = vmatprep.subr.mxu0 0.0
    %184 = vmatpush2.msra.mxu0 0.0
    %185 = vmatprep.subr.mxu0 0.0
    %186 = vmatpush2.msra.mxu0 0.0
    %187 = vmatprep.subr.mxu0 0.0
    %188 = vmatpush2.msra.mxu0 0.0
    %189 = vmatprep.subr.mxu0 0.0
    %190 = vmatpush2.msra.mxu0 0.0
    %191 = vmatprep.subr.mxu0 0.0
    %192 = vmatpush2.msra.mxu0 0.0
    %193 = vmatprep.subr.mxu0 0.0
    %194 = vmatpush2.msra.mxu0 0.0
    %195 = vmatprep.subr.mxu0 0.0
    %196 = vmatpush2.msra.mxu0 0.0
    %197 = vmatprep.subr.mxu0 0.0
    %198 = vmatpush2.msra.mxu0 0.0
    %199 = vmatprep.subr.mxu0 0.0
    %200 = vmatpush2.msra.mxu0 0.0
    %201 = vmatprep.subr.mxu0 0.0
    %202 = vmatpush2.msra.mxu0 0.0
    %203 = vmatprep.subr.mxu0 0.0
    %204 = vmatpush2.msra.mxu0 0.0
    %205 = vmatprep.mubr.f32.mxu0 0.0
    %206 = vmatmul.mubr.f32.gmra.mxu0 %v136
    %v207 = vpop.f32.mrf.mxu0
    %v208 = vadd.f32 %v132, %v207
    %v209 = vpop.f32.mrf.mxu0
    %210 = vmatprep.mubr.f32.mxu0 0.0
    %211 = vmatmul.mubr.f32.gmra.mxu0 %v139
    %v212 = vpop.f32.mrf.mxu0
    %v213 = vadd.f32 %v132, %v212
    %v214 = vpop.f32.mrf.mxu0
    %215 = vdwg.mxu0
    %v216 = vld [vmem:[#allocation6] sm:$0xff]
    %v217 = vld [vmem:[#allocation6 + $0x8] sm:$0xff]
    %v218 = vld [vmem:[#allocation6 + $0x10] sm:$0xf]
    %v219 = vld [vmem:[#allocation9] sm:$0xff]
    %v220 = vld [vmem:[#allocation9 + $0x8] sm:$0xff]
    %v221 = vld [vmem:[#allocation9 + $0x10] sm:$0xff]
    %v222 = vld [vmem:[#allocation9 + $0x18] sm:$0xff]
    %v223 = vld [vmem:[%s6] sm:$0x1]
    %v225 = vlaneseq
    %v226 = vshrl.u32 %v225, 7
    %v227 = vsub.s32 0, %v226
    %v228 = vrot.slane %v223, %v227
    %v231 = vsel %vm134, %v216, 0
    %v234 = vsel %vm134, %v217, 0
    %v237 = vsel %vm134, %v218, 0
    %239 = vmatprep.subr.mxu0 0.0
    %240 = vmatpush1.msra.mxu0 0.0
    %241 = vmatprep.subr.mxu0 0.0
    %242 = vmatpush1.msra.mxu0 0.0
    %243 = vmatprep.subr.mxu0 0.0
    %244 = vmatpush1.msra.mxu0 0.0
    %245 = vmatprep.subr.mxu0 0.0
    %246 = vmatpush1.msra.mxu0 0.0
    %247 = vmatprep.subr.mxu0 0.0
    %248 = vmatpush1.msra.mxu0 0.0
    %249 = vmatprep.subr.mxu0 0.0
    %250 = vmatpush1.msra.mxu0 0.0
    %251 = vmatprep.subr.mxu0 0.0
    %252 = vmatpush1.msra.mxu0 0.0
    %253 = vmatprep.subr.mxu0 0.0
    %254 = vmatpush1.msra.mxu0 0.0
    %255 = vmatprep.subr.mxu0 0.0
    %256 = vmatpush1.msra.mxu0 0.0
    %257 = vmatprep.subr.mxu0 0.0
    %258 = vmatpush1.msra.mxu0 0.0
    %259 = vmatprep.subr.mxu0 0.0
    %260 = vmatpush1.msra.mxu0 0.0
    %261 = vmatprep.subr.mxu0 0.0
    %262 = vmatpush1.msra.mxu0 0.0
    %263 = vmatprep.subr.mxu0 0.0
    %264 = vmatpush1.msra.mxu0 %v222
    %265 = vmatprep.subr.mxu0 0.0
    %266 = vmatpush1.msra.mxu0 %v221
    %267 = vmatprep.subr.mxu0 0.0
    %268 = vmatpush1.msra.mxu0 %v220
    %269 = vmatprep.subr.mxu0 0.0
    %270 = vmatpush1.msra.mxu0 %v219
    %271 = vmatprep.subr.mxu0 0.0
    %272 = vmatpush2.msra.mxu0 0.0
    %273 = vmatprep.subr.mxu0 0.0
    %274 = vmatpush2.msra.mxu0 0.0
    %275 = vmatprep.subr.mxu0 0.0
    %276 = vmatpush2.msra.mxu0 0.0
    %277 = vmatprep.subr.mxu0 0.0
    %278 = vmatpush2.msra.mxu0 0.0
    %279 = vmatprep.subr.mxu0 0.0
    %280 = vmatpush2.msra.mxu0 0.0
    %281 = vmatprep.subr.mxu0 0.0
    %282 = vmatpush2.msra.mxu0 0.0
    %283 = vmatprep.subr.mxu0 0.0
    %284 = vmatpush2.msra.mxu0 0.0
    %285 = vmatprep.subr.mxu0 0.0
    %286 = vmatpush2.msra.mxu0 0.0
    %287 = vmatprep.subr.mxu0 0.0
    %288 = vmatpush2.msra.mxu0 0.0
    %289 = vmatprep.subr.mxu0 0.0
    %290 = vmatpush2.msra.mxu0 0.0
    %291 = vmatprep.subr.mxu0 0.0
    %292 = vmatpush2.msra.mxu0 0.0
    %293 = vmatprep.subr.mxu0 0.0
    %294 = vmatpush2.msra.mxu0 0.0
    %295 = vmatprep.subr.mxu0 0.0
    %296 = vmatpush2.msra.mxu0 0.0
    %297 = vmatprep.subr.mxu0 0.0
    %298 = vmatpush2.msra.mxu0 0.0
    %299 = vmatprep.subr.mxu0 0.0
    %300 = vmatpush2.msra.mxu0 0.0
    %301 = vmatprep.subr.mxu0 0.0
    %302 = vmatpush2.msra.mxu0 0.0
    %303 = vmatprep.mubr.f32.mxu0 0.0
    %304 = vmatmul.mubr.f32.gmra.mxu0 %v231
    %v305 = vpop.f32.mrf.mxu0
    %v306 = vadd.f32 %v228, %v305
    %v307 = vpop.f32.mrf.mxu0
    %308 = vmatprep.mubr.f32.mxu0 0.0
    %309 = vmatmul.mubr.f32.gmra.mxu0 %v234
    %v310 = vpop.f32.mrf.mxu0
    %v311 = vadd.f32 %v228, %v310
    %v312 = vpop.f32.mrf.mxu0
    %313 = vmatprep.mubr.f32.mxu0 0.0
    %314 = vmatmul.mubr.f32.gmra.mxu0 %v237
    %v315 = vpop.f32.mrf.mxu0
    %v316 = vadd.f32 %v228, %v315
    %v317 = vpop.f32.mrf.mxu0
    %318 = vdwg.mxu0
    %v319 = vld [vmem:[#allocation11] sm:$0xff]
    %v320 = vld [vmem:[#allocation11 + $0x8] sm:$0xff]
    %v321 = vld [vmem:[#allocation11 + $0x10] sm:$0xff]
    %v322 = vld [vmem:[#allocation11 + $0x18] sm:$0xff]
    %v323 = vld [vmem:[%s8] sm:$0x1]
    %v325 = vlaneseq
    %v326 = vshrl.u32 %v325, 7
    %v327 = vsub.s32 0, %v326
    %v328 = vrot.slane %v323, %v327
    %330 = vmatprep.subr.mxu0 0.0
    %331 = vmatpush1.msra.mxu0 0.0
    %332 = vmatprep.subr.mxu0 0.0
    %333 = vmatpush1.msra.mxu0 0.0
    %334 = vmatprep.subr.mxu0 0.0
    %335 = vmatpush1.msra.mxu0 0.0
    %336 = vmatprep.subr.mxu0 0.0
    %337 = vmatpush1.msra.mxu0 0.0
    %338 = vmatprep.subr.mxu0 0.0
    %339 = vmatpush1.msra.mxu0 0.0
    %340 = vmatprep.subr.mxu0 0.0
    %341 = vmatpush1.msra.mxu0 0.0
    %342 = vmatprep.subr.mxu0 0.0
    %343 = vmatpush1.msra.mxu0 0.0
    %344 = vmatprep.subr.mxu0 0.0
    %345 = vmatpush1.msra.mxu0 0.0
    %346 = vmatprep.subr.mxu0 0.0
    %347 = vmatpush1.msra.mxu0 0.0
    %348 = vmatprep.subr.mxu0 0.0
    %349 = vmatpush1.msra.mxu0 0.0
    %350 = vmatprep.subr.mxu0 0.0
    %351 = vmatpush1.msra.mxu0 0.0
    %352 = vmatprep.subr.mxu0 0.0
    %353 = vmatpush1.msra.mxu0 0.0
    %354 = vmatprep.subr.mxu0 0.0
    %355 = vmatpush1.msra.mxu0 %v322
    %356 = vmatprep.subr.mxu0 0.0
    %357 = vmatpush1.msra.mxu0 %v321
    %358 = vmatprep.subr.mxu0 0.0
    %359 = vmatpush1.msra.mxu0 %v320
    %360 = vmatprep.subr.mxu0 0.0
    %361 = vmatpush1.msra.mxu0 %v319
    %362 = vmatprep.subr.mxu0 0.0
    %363 = vmatpush2.msra.mxu0 0.0
    %364 = vmatprep.subr.mxu0 0.0
    %365 = vmatpush2.msra.mxu0 0.0
    %366 = vmatprep.subr.mxu0 0.0
    %367 = vmatpush2.msra.mxu0 0.0
    %368 = vmatprep.subr.mxu0 0.0
    %369 = vmatpush2.msra.mxu0 0.0
    %370 = vmatprep.subr.mxu0 0.0
    %371 = vmatpush2.msra.mxu0 0.0
    %372 = vmatprep.subr.mxu0 0.0
    %373 = vmatpush2.msra.mxu0 0.0
    %374 = vmatprep.subr.mxu0 0.0
    %375 = vmatpush2.msra.mxu0 0.0
    %376 = vmatprep.subr.mxu0 0.0
    %377 = vmatpush2.msra.mxu0 0.0
    %378 = vmatprep.subr.mxu0 0.0
    %379 = vmatpush2.msra.mxu0 0.0
    %380 = vmatprep.subr.mxu0 0.0
    %381 = vmatpush2.msra.mxu0 0.0
    %382 = vmatprep.subr.mxu0 0.0
    %383 = vmatpush2.msra.mxu0 0.0
    %384 = vmatprep.subr.mxu0 0.0
    %385 = vmatpush2.msra.mxu0 0.0
    %386 = vmatprep.subr.mxu0 0.0
    %387 = vmatpush2.msra.mxu0 0.0
    %388 = vmatprep.subr.mxu0 0.0
    %389 = vmatpush2.msra.mxu0 0.0
    %390 = vmatprep.subr.mxu0 0.0
    %391 = vmatpush2.msra.mxu0 0.0
    %392 = vmatprep.subr.mxu0 0.0
    %393 = vmatpush2.msra.mxu0 0.0
    %394 = vmatprep.mubr.f32.mxu0 0.0
    %395 = vmatmul.mubr.f32.gmra.mxu0 %v231
    %v396 = vpop.f32.mrf.mxu0
    %v397 = vadd.f32 %v328, %v396
    %v398 = vpop.f32.mrf.mxu0
    %399 = vmatprep.mubr.f32.mxu0 0.0
    %400 = vmatmul.mubr.f32.gmra.mxu0 %v234
    %v401 = vpop.f32.mrf.mxu0
    %v402 = vadd.f32 %v328, %v401
    %v403 = vpop.f32.mrf.mxu0
    %404 = vmatprep.mubr.f32.mxu0 0.0
    %405 = vmatmul.mubr.f32.gmra.mxu0 %v237
    %v406 = vpop.f32.mrf.mxu0
    %v407 = vadd.f32 %v328, %v406
    %v408 = vpop.f32.mrf.mxu0
    %409 = vdwg.mxu0
    %v410 = vld [vmem:[%s2] sm:$0x3]
    %v411 = vlaneseq
    %v412 = vshrl.u32 %v411, 7
    %v413 = vsub.s32 0, %v412
    %v414 = vrot.slane %v410, %v413
    %vm415 = vcmask 64512
    %v417 = vsel %vm415, %v208, 0
    %v420 = vsel %vm415, %v306, 0
    %v423 = vsel %vm415, %v311, 0
    %425 = vmatprep.subr.mxu0 0.0
    %426 = vmatpush1.xpose.msra.mxu0 0.0
    %427 = vmatprep.subr.mxu0 0.0
    %428 = vmatpush1.xpose.msra.mxu0 0.0
    %429 = vmatprep.subr.mxu0 0.0
    %430 = vmatpush1.xpose.msra.mxu0 0.0
    %431 = vmatprep.subr.mxu0 0.0
    %432 = vmatpush1.xpose.msra.mxu0 0.0
    %433 = vmatprep.subr.mxu0 0.0
    %434 = vmatpush1.xpose.msra.mxu0 0.0
    %435 = vmatprep.subr.mxu0 0.0
    %436 = vmatpush1.xpose.msra.mxu0 0.0
    %437 = vmatprep.subr.mxu0 0.0
    %438 = vmatpush1.xpose.msra.mxu0 0.0
    %439 = vmatprep.subr.mxu0 0.0
    %440 = vmatpush1.xpose.msra.mxu0 0.0
    %441 = vmatprep.subr.mxu0 0.0
    %442 = vmatpush1.xpose.msra.mxu0 0.0
    %443 = vmatprep.subr.mxu0 0.0
    %444 = vmatpush1.xpose.msra.mxu0 0.0
    %445 = vmatprep.subr.mxu0 0.0
    %446 = vmatpush1.xpose.msra.mxu0 0.0
    %447 = vmatprep.subr.mxu0 0.0
    %448 = vmatpush1.xpose.msra.mxu0 0.0
    %449 = vmatprep.subr.mxu0 0.0
    %450 = vmatpush1.xpose.msra.mxu0 0.0
    %451 = vmatprep.subr.mxu0 0.0
    %452 = vmatpush1.xpose.msra.mxu0 0.0
    %453 = vmatprep.subr.mxu0 0.0
    %454 = vmatpush1.xpose.msra.mxu0 %v423
    %455 = vmatprep.subr.mxu0 0.0
    %456 = vmatpush1.xpose.msra.mxu0 %v420
    %457 = vmatprep.subr.mxu0 0.0
    %458 = vmatpush2.xpose.msra.mxu0 0.0
    %459 = vmatprep.subr.mxu0 0.0
    %460 = vmatpush2.xpose.msra.mxu0 0.0
    %461 = vmatprep.subr.mxu0 0.0
    %462 = vmatpush2.xpose.msra.mxu0 0.0
    %463 = vmatprep.subr.mxu0 0.0
    %464 = vmatpush2.xpose.msra.mxu0 0.0
    %465 = vmatprep.subr.mxu0 0.0
    %466 = vmatpush2.xpose.msra.mxu0 0.0
    %467 = vmatprep.subr.mxu0 0.0
    %468 = vmatpush2.xpose.msra.mxu0 0.0
    %469 = vmatprep.subr.mxu0 0.0
    %470 = vmatpush2.xpose.msra.mxu0 0.0
    %471 = vmatprep.subr.mxu0 0.0
    %472 = vmatpush2.xpose.msra.mxu0 0.0
    %473 = vmatprep.subr.mxu0 0.0
    %474 = vmatpush2.xpose.msra.mxu0 0.0
    %475 = vmatprep.subr.mxu0 0.0
    %476 = vmatpush2.xpose.msra.mxu0 0.0
    %477 = vmatprep.subr.mxu0 0.0
    %478 = vmatpush2.xpose.msra.mxu0 0.0
    %479 = vmatprep.subr.mxu0 0.0
    %480 = vmatpush2.xpose.msra.mxu0 0.0
    %481 = vmatprep.subr.mxu0 0.0
    %482 = vmatpush2.xpose.msra.mxu0 0.0
    %483 = vmatprep.subr.mxu0 0.0
    %484 = vmatpush2.xpose.msra.mxu0 0.0
    %485 = vmatprep.subr.mxu0 0.0
    %486 = vmatpush2.xpose.msra.mxu0 0.0
    %487 = vmatprep.subr.mxu0 0.0
    %488 = vmatpush2.xpose.msra.mxu0 0.0
    %489 = vmatprep.mubr.f32.mxu0 0.0
    %490 = vmatmul.mubr.f32.gmra.mxu0 %v417
    %v491 = vpop.f32.mrf.mxu0
    %v492 = vadd.f32 %v414, %v491
    %v493 = vpop.f32.mrf.mxu0
    %494 = vdwg.mxu0
    %vm495 = vcmask 80896
    %v496 = vsel %vm495, %v492, -inf
    %497 = vmax.xlane.f32.xlu0 %v496
    %v498 = vpop.xlane.xlu0 %497
    %v499 = vsub.f32 %v492, %v498
    %v500 = vmul.f32 %v499, 1.442695
    %v501 = vpow.pop %v500
    %v502 = vsel %vm495, %v501, 0.0
    %503 = vadd.xlane.f32.xlu0 %v502
    %v504 = vpop.xlane.xlu0 %503
    %v505 = vrcp.pop %v504
    %v506 = vmul.f32 %v501, %v505
    %v508 = vsel %vm495, %v506, 0
    %vm510 = vcmask 1041408
    %v512 = vsel %vm510, %v402, 0
    %514 = vmatprep.subr.mxu0 0.0
    %515 = vmatpush1.msra.mxu0 0.0
    %516 = vmatprep.subr.mxu0 0.0
    %517 = vmatpush1.msra.mxu0 0.0
    %518 = vmatprep.subr.mxu0 0.0
    %519 = vmatpush1.msra.mxu0 0.0
    %520 = vmatprep.subr.mxu0 0.0
    %521 = vmatpush1.msra.mxu0 0.0
    %522 = vmatprep.subr.mxu0 0.0
    %523 = vmatpush1.msra.mxu0 0.0
    %524 = vmatprep.subr.mxu0 0.0
    %525 = vmatpush1.msra.mxu0 0.0
    %526 = vmatprep.subr.mxu0 0.0
    %527 = vmatpush1.msra.mxu0 0.0
    %528 = vmatprep.subr.mxu0 0.0
    %529 = vmatpush1.msra.mxu0 0.0
    %530 = vmatprep.subr.mxu0 0.0
    %531 = vmatpush1.msra.mxu0 0.0
    %532 = vmatprep.subr.mxu0 0.0
    %533 = vmatpush1.msra.mxu0 0.0
    %534 = vmatprep.subr.mxu0 0.0
    %535 = vmatpush1.msra.mxu0 0.0
    %536 = vmatprep.subr.mxu0 0.0
    %537 = vmatpush1.msra.mxu0 0.0
    %538 = vmatprep.subr.mxu0 0.0
    %539 = vmatpush1.msra.mxu0 0.0
    %540 = vmatprep.subr.mxu0 0.0
    %541 = vmatpush1.msra.mxu0 0.0
    %542 = vmatprep.subr.mxu0 0.0
    %543 = vmatpush1.msra.mxu0 %v512
    %544 = vmatprep.subr.mxu0 0.0
    %545 = vmatpush1.msra.mxu0 %v397
    %546 = vmatprep.subr.mxu0 0.0
    %547 = vmatpush2.msra.mxu0 0.0
    %548 = vmatprep.subr.mxu0 0.0
    %549 = vmatpush2.msra.mxu0 0.0
    %550 = vmatprep.subr.mxu0 0.0
    %551 = vmatpush2.msra.mxu0 0.0
    %552 = vmatprep.subr.mxu0 0.0
    %553 = vmatpush2.msra.mxu0 0.0
    %554 = vmatprep.subr.mxu0 0.0
    %555 = vmatpush2.msra.mxu0 0.0
    %556 = vmatprep.subr.mxu0 0.0
    %557 = vmatpush2.msra.mxu0 0.0
    %558 = vmatprep.subr.mxu0 0.0
    %559 = vmatpush2.msra.mxu0 0.0
    %560 = vmatprep.subr.mxu0 0.0
    %561 = vmatpush2.msra.mxu0 0.0
    %562 = vmatprep.subr.mxu0 0.0
    %563 = vmatpush2.msra.mxu0 0.0
    %564 = vmatprep.subr.mxu0 0.0
    %565 = vmatpush2.msra.mxu0 0.0
    %566 = vmatprep.subr.mxu0 0.0
    %567 = vmatpush2.msra.mxu0 0.0
    %568 = vmatprep.subr.mxu0 0.0
    %569 = vmatpush2.msra.mxu0 0.0
    %570 = vmatprep.subr.mxu0 0.0
    %571 = vmatpush2.msra.mxu0 0.0
    %572 = vmatprep.subr.mxu0 0.0
    %573 = vmatpush2.msra.mxu0 0.0
    %574 = vmatprep.subr.mxu0 0.0
    %575 = vmatpush2.msra.mxu0 0.0
    %576 = vmatprep.subr.mxu0 0.0
    %577 = vmatpush2.msra.mxu0 0.0
    %578 = vmatprep.mubr.f32.mxu0 0.0
    %579 = vmatmul.mubr.f32.gmra.mxu0 %v508
    %v580 = vpop.f32.mrf.mxu0
    %v581 = vadd.f32 0.0, %v580
    %v582 = vpop.f32.mrf.mxu0
    %583 = vdwg.mxu0
    %584 = vst.msk [vmem:[#allocation2] sm:$0xff] %vm415, %v581
    %585 = vrot.lane.b32.xlu0 %v208, 120
    %v586 = vpop.permute.xlu0 %585
    %587 = vrot.lane.b32.xlu0 %v306, 120
    %v588 = vpop.permute.xlu0 %587
    %589 = vrot.lane.b32.xlu0 %v311, 120
    %v590 = vpop.permute.xlu0 %589
    %v591 = vsel %vm415, %v586, 0
    %v593 = vsel %vm415, %v588, 0
    %v595 = vsel %vm415, %v590, 0
    %597 = vmatprep.subr.mxu0 0.0
    %598 = vmatpush1.xpose.msra.mxu0 0.0
    %599 = vmatprep.subr.mxu0 0.0
    %600 = vmatpush1.xpose.msra.mxu0 0.0
    %601 = vmatprep.subr.mxu0 0.0
    %602 = vmatpush1.xpose.msra.mxu0 0.0
    %603 = vmatprep.subr.mxu0 0.0
    %604 = vmatpush1.xpose.msra.mxu0 0.0
    %605 = vmatprep.subr.mxu0 0.0
    %606 = vmatpush1.xpose.msra.mxu0 0.0
    %607 = vmatprep.subr.mxu0 0.0
    %608 = vmatpush1.xpose.msra.mxu0 0.0
    %609 = vmatprep.subr.mxu0 0.0
    %610 = vmatpush1.xpose.msra.mxu0 0.0
    %611 = vmatprep.subr.mxu0 0.0
    %612 = vmatpush1.xpose.msra.mxu0 0.0
    %613 = vmatprep.subr.mxu0 0.0
    %614 = vmatpush1.xpose.msra.mxu0 0.0
    %615 = vmatprep.subr.mxu0 0.0
    %616 = vmatpush1.xpose.msra.mxu0 0.0
    %617 = vmatprep.subr.mxu0 0.0
    %618 = vmatpush1.xpose.msra.mxu0 0.0
    %619 = vmatprep.subr.mxu0 0.0
    %620 = vmatpush1.xpose.msra.mxu0 0.0
    %621 = vmatprep.subr.mxu0 0.0
    %622 = vmatpush1.xpose.msra.mxu0 0.0
    %623 = vmatprep.subr.mxu0 0.0
    %624 = vmatpush1.xpose.msra.mxu0 0.0
    %625 = vmatprep.subr.mxu0 0.0
    %626 = vmatpush1.xpose.msra.mxu0 %v595
    %627 = vmatprep.subr.mxu0 0.0
    %628 = vmatpush1.xpose.msra.mxu0 %v593
    %629 = vmatprep.subr.mxu0 0.0
    %630 = vmatpush2.xpose.msra.mxu0 0.0
    %631 = vmatprep.subr.mxu0 0.0
    %632 = vmatpush2.xpose.msra.mxu0 0.0
    %633 = vmatprep.subr.mxu0 0.0
    %634 = vmatpush2.xpose.msra.mxu0 0.0
    %635 = vmatprep.subr.mxu0 0.0
    %636 = vmatpush2.xpose.msra.mxu0 0.0
    %637 = vmatprep.subr.mxu0 0.0
    %638 = vmatpush2.xpose.msra.mxu0 0.0
    %639 = vmatprep.subr.mxu0 0.0
    %640 = vmatpush2.xpose.msra.mxu0 0.0
    %641 = vmatprep.subr.mxu0 0.0
    %642 = vmatpush2.xpose.msra.mxu0 0.0
    %643 = vmatprep.subr.mxu0 0.0
    %644 = vmatpush2.xpose.msra.mxu0 0.0
    %645 = vmatprep.subr.mxu0 0.0
    %646 = vmatpush2.xpose.msra.mxu0 0.0
    %647 = vmatprep.subr.mxu0 0.0
    %648 = vmatpush2.xpose.msra.mxu0 0.0
    %649 = vmatprep.subr.mxu0 0.0
    %650 = vmatpush2.xpose.msra.mxu0 0.0
    %651 = vmatprep.subr.mxu0 0.0
    %652 = vmatpush2.xpose.msra.mxu0 0.0
    %653 = vmatprep.subr.mxu0 0.0
    %654 = vmatpush2.xpose.msra.mxu0 0.0
    %655 = vmatprep.subr.mxu0 0.0
    %656 = vmatpush2.xpose.msra.mxu0 0.0
    %657 = vmatprep.subr.mxu0 0.0
    %658 = vmatpush2.xpose.msra.mxu0 0.0
    %659 = vmatprep.subr.mxu0 0.0
    %660 = vmatpush2.xpose.msra.mxu0 0.0
    %661 = vmatprep.mubr.f32.mxu0 0.0
    %662 = vmatmul.mubr.f32.gmra.mxu0 %v591
    %v663 = vpop.f32.mrf.mxu0
    %v664 = vadd.f32 %v414, %v663
    %v665 = vpop.f32.mrf.mxu0
    %666 = vdwg.mxu0
    %v667 = vsel %vm495, %v664, -inf
    %668 = vmax.xlane.f32.xlu0 %v667
    %v669 = vpop.xlane.xlu0 %668
    %v670 = vsub.f32 %v664, %v669
    %v671 = vmul.f32 %v670, 1.442695
    %v672 = vpow.pop %v671
    %v673 = vsel %vm495, %v672, 0.0
    %674 = vadd.xlane.f32.xlu0 %v673
    %v675 = vpop.xlane.xlu0 %674
    %v676 = vrcp.pop %v675
    %v677 = vmul.f32 %v672, %v676
    %679 = vrot.lane.b32.xlu0 %v397, 120
    %v680 = vpop.permute.xlu0 %679
    %681 = vrot.lane.b32.xlu0 %v402, 120
    %v682 = vpop.permute.xlu0 %681
    %v685 = vsel %vm495, %v677, 0
    %v687 = vsel %vm510, %v682, 0
    %689 = vmatprep.subr.mxu0 0.0
    %690 = vmatpush1.msra.mxu0 0.0
    %691 = vmatprep.subr.mxu0 0.0
    %692 = vmatpush1.msra.mxu0 0.0
    %693 = vmatprep.subr.mxu0 0.0
    %694 = vmatpush1.msra.mxu0 0.0
    %695 = vmatprep.subr.mxu0 0.0
    %696 = vmatpush1.msra.mxu0 0.0
    %697 = vmatprep.subr.mxu0 0.0
    %698 = vmatpush1.msra.mxu0 0.0
    %699 = vmatprep.subr.mxu0 0.0
    %700 = vmatpush1.msra.mxu0 0.0
    %701 = vmatprep.subr.mxu0 0.0
    %702 = vmatpush1.msra.mxu0 0.0
    %703 = vmatprep.subr.mxu0 0.0
    %704 = vmatpush1.msra.mxu0 0.0
    %705 = vmatprep.subr.mxu0 0.0
    %706 = vmatpush1.msra.mxu0 0.0
    %707 = vmatprep.subr.mxu0 0.0
    %708 = vmatpush1.msra.mxu0 0.0
    %709 = vmatprep.subr.mxu0 0.0
    %710 = vmatpush1.msra.mxu0 0.0
    %711 = vmatprep.subr.mxu0 0.0
    %712 = vmatpush1.msra.mxu0 0.0
    %713 = vmatprep.subr.mxu0 0.0
    %714 = vmatpush1.msra.mxu0 0.0
    %715 = vmatprep.subr.mxu0 0.0
    %716 = vmatpush1.msra.mxu0 0.0
    %717 = vmatprep.subr.mxu0 0.0
    %718 = vmatpush1.msra.mxu0 %v687
    %719 = vmatprep.subr.mxu0 0.0
    %720 = vmatpush1.msra.mxu0 %v680
    %721 = vmatprep.subr.mxu0 0.0
    %722 = vmatpush2.msra.mxu0 0.0
    %723 = vmatprep.subr.mxu0 0.0
    %724 = vmatpush2.msra.mxu0 0.0
    %725 = vmatprep.subr.mxu0 0.0
    %726 = vmatpush2.msra.mxu0 0.0
    %727 = vmatprep.subr.mxu0 0.0
    %728 = vmatpush2.msra.mxu0 0.0
    %729 = vmatprep.subr.mxu0 0.0
    %730 = vmatpush2.msra.mxu0 0.0
    %731 = vmatprep.subr.mxu0 0.0
    %732 = vmatpush2.msra.mxu0 0.0
    %733 = vmatprep.subr.mxu0 0.0
    %734 = vmatpush2.msra.mxu0 0.0
    %735 = vmatprep.subr.mxu0 0.0
    %736 = vmatpush2.msra.mxu0 0.0
    %737 = vmatprep.subr.mxu0 0.0
    %738 = vmatpush2.msra.mxu0 0.0
    %739 = vmatprep.subr.mxu0 0.0
    %740 = vmatpush2.msra.mxu0 0.0
    %741 = vmatprep.subr.mxu0 0.0
    %742 = vmatpush2.msra.mxu0 0.0
    %743 = vmatprep.subr.mxu0 0.0
    %744 = vmatpush2.msra.mxu0 0.0
    %745 = vmatprep.subr.mxu0 0.0
    %746 = vmatpush2.msra.mxu0 0.0
    %747 = vmatprep.subr.mxu0 0.0
    %748 = vmatpush2.msra.mxu0 0.0
    %749 = vmatprep.subr.mxu0 0.0
    %750 = vmatpush2.msra.mxu0 0.0
    %751 = vmatprep.subr.mxu0 0.0
    %752 = vmatpush2.msra.mxu0 0.0
    %753 = vmatprep.mubr.f32.mxu0 0.0
    %754 = vmatmul.mubr.f32.gmra.mxu0 %v685
    %v755 = vpop.f32.mrf.mxu0
    %v756 = vadd.f32 0.0, %v755
    %v757 = vpop.f32.mrf.mxu0
    %758 = vdwg.mxu0
    %760 = vrot.lane.b32.xlu0 %v756, 8
    %v761 = vpop.permute.xlu0 %760
    %vm763 = vcmask 130112
    %764 = vst.msk [vmem:[#allocation2] sm:$0xff] %vm763, %v761
    %765 = vrot.lane.b32.xlu0 %v208, 112
    %v766 = vpop.permute.xlu0 %765
    %767 = vrot.lane.b32.xlu0 %v306, 112
    %v768 = vpop.permute.xlu0 %767
    %769 = vrot.lane.b32.xlu0 %v311, 112
    %v770 = vpop.permute.xlu0 %769
    %v771 = vsel %vm415, %v766, 0
    %v773 = vsel %vm415, %v768, 0
    %v775 = vsel %vm415, %v770, 0
    %777 = vmatprep.subr.mxu0 0.0
    %778 = vmatpush1.xpose.msra.mxu0 0.0
    %779 = vmatprep.subr.mxu0 0.0
    %780 = vmatpush1.xpose.msra.mxu0 0.0
    %781 = vmatprep.subr.mxu0 0.0
    %782 = vmatpush1.xpose.msra.mxu0 0.0
    %783 = vmatprep.subr.mxu0 0.0
    %784 = vmatpush1.xpose.msra.mxu0 0.0
    %785 = vmatprep.subr.mxu0 0.0
    %786 = vmatpush1.xpose.msra.mxu0 0.0
    %787 = vmatprep.subr.mxu0 0.0
    %788 = vmatpush1.xpose.msra.mxu0 0.0
    %789 = vmatprep.subr.mxu0 0.0
    %790 = vmatpush1.xpose.msra.mxu0 0.0
    %791 = vmatprep.subr.mxu0 0.0
    %792 = vmatpush1.xpose.msra.mxu0 0.0
    %793 = vmatprep.subr.mxu0 0.0
    %794 = vmatpush1.xpose.msra.mxu0 0.0
    %795 = vmatprep.subr.mxu0 0.0
    %796 = vmatpush1.xpose.msra.mxu0 0.0
    %797 = vmatprep.subr.mxu0 0.0
    %798 = vmatpush1.xpose.msra.mxu0 0.0
    %799 = vmatprep.subr.mxu0 0.0
    %800 = vmatpush1.xpose.msra.mxu0 0.0
    %801 = vmatprep.subr.mxu0 0.0
    %802 = vmatpush1.xpose.msra.mxu0 0.0
    %803 = vmatprep.subr.mxu0 0.0
    %804 = vmatpush1.xpose.msra.mxu0 0.0
    %805 = vmatprep.subr.mxu0 0.0
    %806 = vmatpush1.xpose.msra.mxu0 %v775
    %807 = vmatprep.subr.mxu0 0.0
    %808 = vmatpush1.xpose.msra.mxu0 %v773
    %809 = vmatprep.subr.mxu0 0.0
    %810 = vmatpush2.xpose.msra.mxu0 0.0
    %811 = vmatprep.subr.mxu0 0.0
    %812 = vmatpush2.xpose.msra.mxu0 0.0
    %813 = vmatprep.subr.mxu0 0.0
    %814 = vmatpush2.xpose.msra.mxu0 0.0
    %815 = vmatprep.subr.mxu0 0.0
    %816 = vmatpush2.xpose.msra.mxu0 0.0
    %817 = vmatprep.subr.mxu0 0.0
    %818 = vmatpush2.xpose.msra.mxu0 0.0
    %819 = vmatprep.subr.mxu0 0.0
    %820 = vmatpush2.xpose.msra.mxu0 0.0
    %821 = vmatprep.subr.mxu0 0.0
    %822 = vmatpush2.xpose.msra.mxu0 0.0
    %823 = vmatprep.subr.mxu0 0.0
    %824 = vmatpush2.xpose.msra.mxu0 0.0
    %825 = vmatprep.subr.mxu0 0.0
    %826 = vmatpush2.xpose.msra.mxu0 0.0
    %827 = vmatprep.subr.mxu0 0.0
    %828 = vmatpush2.xpose.msra.mxu0 0.0
    %829 = vmatprep.subr.mxu0 0.0
    %830 = vmatpush2.xpose.msra.mxu0 0.0
    %831 = vmatprep.subr.mxu0 0.0
    %832 = vmatpush2.xpose.msra.mxu0 0.0
    %833 = vmatprep.subr.mxu0 0.0
    %834 = vmatpush2.xpose.msra.mxu0 0.0
    %835 = vmatprep.subr.mxu0 0.0
    %836 = vmatpush2.xpose.msra.mxu0 0.0
    %837 = vmatprep.subr.mxu0 0.0
    %838 = vmatpush2.xpose.msra.mxu0 0.0
    %839 = vmatprep.subr.mxu0 0.0
    %840 = vmatpush2.xpose.msra.mxu0 0.0
    %841 = vmatprep.mubr.f32.mxu0 0.0
    %842 = vmatmul.mubr.f32.gmra.mxu0 %v771
    %v843 = vpop.f32.mrf.mxu0
    %v844 = vadd.f32 %v414, %v843
    %v845 = vpop.f32.mrf.mxu0
    %846 = vdwg.mxu0
    %v847 = vsel %vm495, %v844, -inf
    %848 = vmax.xlane.f32.xlu0 %v847
    %v849 = vpop.xlane.xlu0 %848
    %v850 = vsub.f32 %v844, %v849
    %v851 = vmul.f32 %v850, 1.442695
    %v852 = vpow.pop %v851
    %v853 = vsel %vm495, %v852, 0.0
    %854 = vadd.xlane.f32.xlu0 %v853
    %v855 = vpop.xlane.xlu0 %854
    %v856 = vrcp.pop %v855
    %v857 = vmul.f32 %v852, %v856
    %858 = vrot.lane.b32.xlu0 %v397, 112
    %v859 = vpop.permute.xlu0 %858
    %860 = vrot.lane.b32.xlu0 %v402, 112
    %v861 = vpop.permute.xlu0 %860
    %v864 = vsel %vm495, %v857, 0
    %v866 = vsel %vm510, %v861, 0
    %868 = vmatprep.subr.mxu0 0.0
    %869 = vmatpush1.msra.mxu0 0.0
    %870 = vmatprep.subr.mxu0 0.0
    %871 = vmatpush1.msra.mxu0 0.0
    %872 = vmatprep.subr.mxu0 0.0
    %873 = vmatpush1.msra.mxu0 0.0
    %874 = vmatprep.subr.mxu0 0.0
    %875 = vmatpush1.msra.mxu0 0.0
    %876 = vmatprep.subr.mxu0 0.0
    %877 = vmatpush1.msra.mxu0 0.0
    %878 = vmatprep.subr.mxu0 0.0
    %879 = vmatpush1.msra.mxu0 0.0
    %880 = vmatprep.subr.mxu0 0.0
    %881 = vmatpush1.msra.mxu0 0.0
    %882 = vmatprep.subr.mxu0 0.0
    %883 = vmatpush1.msra.mxu0 0.0
    %884 = vmatprep.subr.mxu0 0.0
    %885 = vmatpush1.msra.mxu0 0.0
    %886 = vmatprep.subr.mxu0 0.0
    %887 = vmatpush1.msra.mxu0 0.0
    %888 = vmatprep.subr.mxu0 0.0
    %889 = vmatpush1.msra.mxu0 0.0
    %890 = vmatprep.subr.mxu0 0.0
    %891 = vmatpush1.msra.mxu0 0.0
    %892 = vmatprep.subr.mxu0 0.0
    %893 = vmatpush1.msra.mxu0 0.0
    %894 = vmatprep.subr.mxu0 0.0
    %895 = vmatpush1.msra.mxu0 0.0
    %896 = vmatprep.subr.mxu0 0.0
    %897 = vmatpush1.msra.mxu0 %v866
    %898 = vmatprep.subr.mxu0 0.0
    %899 = vmatpush1.msra.mxu0 %v859
    %900 = vmatprep.subr.mxu0 0.0
    %901 = vmatpush2.msra.mxu0 0.0
    %902 = vmatprep.subr.mxu0 0.0
    %903 = vmatpush2.msra.mxu0 0.0
    %904 = vmatprep.subr.mxu0 0.0
    %905 = vmatpush2.msra.mxu0 0.0
    %906 = vmatprep.subr.mxu0 0.0
    %907 = vmatpush2.msra.mxu0 0.0
    %908 = vmatprep.subr.mxu0 0.0
    %909 = vmatpush2.msra.mxu0 0.0
    %910 = vmatprep.subr.mxu0 0.0
    %911 = vmatpush2.msra.mxu0 0.0
    %912 = vmatprep.subr.mxu0 0.0
    %913 = vmatpush2.msra.mxu0 0.0
    %914 = vmatprep.subr.mxu0 0.0
    %915 = vmatpush2.msra.mxu0 0.0
    %916 = vmatprep.subr.mxu0 0.0
    %917 = vmatpush2.msra.mxu0 0.0
    %918 = vmatprep.subr.mxu0 0.0
    %919 = vmatpush2.msra.mxu0 0.0
    %920 = vmatprep.subr.mxu0 0.0
    %921 = vmatpush2.msra.mxu0 0.0
    %922 = vmatprep.subr.mxu0 0.0
    %923 = vmatpush2.msra.mxu0 0.0
    %924 = vmatprep.subr.mxu0 0.0
    %925 = vmatpush2.msra.mxu0 0.0
    %926 = vmatprep.subr.mxu0 0.0
    %927 = vmatpush2.msra.mxu0 0.0
    %928 = vmatprep.subr.mxu0 0.0
    %929 = vmatpush2.msra.mxu0 0.0
    %930 = vmatprep.subr.mxu0 0.0
    %931 = vmatpush2.msra.mxu0 0.0
    %932 = vmatprep.mubr.f32.mxu0 0.0
    %933 = vmatmul.mubr.f32.gmra.mxu0 %v864
    %v934 = vpop.f32.mrf.mxu0
    %v935 = vadd.f32 0.0, %v934
    %v936 = vpop.f32.mrf.mxu0
    %937 = vdwg.mxu0
    %939 = vrot.lane.b32.xlu0 %v935, 16
    %v940 = vpop.permute.xlu0 %939
    %vm942 = vcmask 195712
    %943 = vst.msk [vmem:[#allocation2] sm:$0xff] %vm942, %v940
    %944 = vrot.lane.b32.xlu0 %v208, 104
    %v945 = vpop.permute.xlu0 %944
    %946 = vrot.lane.b32.xlu0 %v306, 104
    %v947 = vpop.permute.xlu0 %946
    %948 = vrot.lane.b32.xlu0 %v311, 104
    %v949 = vpop.permute.xlu0 %948
    %v950 = vsel %vm415, %v945, 0
    %v952 = vsel %vm415, %v947, 0
    %v954 = vsel %vm415, %v949, 0
    %956 = vmatprep.subr.mxu0 0.0
    %957 = vmatpush1.xpose.msra.mxu0 0.0
    %958 = vmatprep.subr.mxu0 0.0
    %959 = vmatpush1.xpose.msra.mxu0 0.0
    %960 = vmatprep.subr.mxu0 0.0
    %961 = vmatpush1.xpose.msra.mxu0 0.0
    %962 = vmatprep.subr.mxu0 0.0
    %963 = vmatpush1.xpose.msra.mxu0 0.0
    %964 = vmatprep.subr.mxu0 0.0
    %965 = vmatpush1.xpose.msra.mxu0 0.0
    %966 = vmatprep.subr.mxu0 0.0
    %967 = vmatpush1.xpose.msra.mxu0 0.0
    %968 = vmatprep.subr.mxu0 0.0
    %969 = vmatpush1.xpose.msra.mxu0 0.0
    %970 = vmatprep.subr.mxu0 0.0
    %971 = vmatpush1.xpose.msra.mxu0 0.0
    %972 = vmatprep.subr.mxu0 0.0
    %973 = vmatpush1.xpose.msra.mxu0 0.0
    %974 = vmatprep.subr.mxu0 0.0
    %975 = vmatpush1.xpose.msra.mxu0 0.0
    %976 = vmatprep.subr.mxu0 0.0
    %977 = vmatpush1.xpose.msra.mxu0 0.0
    %978 = vmatprep.subr.mxu0 0.0
    %979 = vmatpush1.xpose.msra.mxu0 0.0
    %980 = vmatprep.subr.mxu0 0.0
    %981 = vmatpush1.xpose.msra.mxu0 0.0
    %982 = vmatprep.subr.mxu0 0.0
    %983 = vmatpush1.xpose.msra.mxu0 0.0
    %984 = vmatprep.subr.mxu0 0.0
    %985 = vmatpush1.xpose.msra.mxu0 %v954
    %986 = vmatprep.subr.mxu0 0.0
    %987 = vmatpush1.xpose.msra.mxu0 %v952
    %988 = vmatprep.subr.mxu0 0.0
    %989 = vmatpush2.xpose.msra.mxu0 0.0
    %990 = vmatprep.subr.mxu0 0.0
    %991 = vmatpush2.xpose.msra.mxu0 0.0
    %992 = vmatprep.subr.mxu0 0.0
    %993 = vmatpush2.xpose.msra.mxu0 0.0
    %994 = vmatprep.subr.mxu0 0.0
    %995 = vmatpush2.xpose.msra.mxu0 0.0
    %996 = vmatprep.subr.mxu0 0.0
    %997 = vmatpush2.xpose.msra.mxu0 0.0
    %998 = vmatprep.subr.mxu0 0.0
    %999 = vmatpush2.xpose.msra.mxu0 0.0
    %1000 = vmatprep.subr.mxu0 0.0
    %1001 = vmatpush2.xpose.msra.mxu0 0.0
    %1002 = vmatprep.subr.mxu0 0.0
    %1003 = vmatpush2.xpose.msra.mxu0 0.0
    %1004 = vmatprep.subr.mxu0 0.0
    %1005 = vmatpush2.xpose.msra.mxu0 0.0
    %1006 = vmatprep.subr.mxu0 0.0
    %1007 = vmatpush2.xpose.msra.mxu0 0.0
    %1008 = vmatprep.subr.mxu0 0.0
    %1009 = vmatpush2.xpose.msra.mxu0 0.0
    %1010 = vmatprep.subr.mxu0 0.0
    %1011 = vmatpush2.xpose.msra.mxu0 0.0
    %1012 = vmatprep.subr.mxu0 0.0
    %1013 = vmatpush2.xpose.msra.mxu0 0.0
    %1014 = vmatprep.subr.mxu0 0.0
    %1015 = vmatpush2.xpose.msra.mxu0 0.0
    %1016 = vmatprep.subr.mxu0 0.0
    %1017 = vmatpush2.xpose.msra.mxu0 0.0
    %1018 = vmatprep.subr.mxu0 0.0
    %1019 = vmatpush2.xpose.msra.mxu0 0.0
    %1020 = vmatprep.mubr.f32.mxu0 0.0
    %1021 = vmatmul.mubr.f32.gmra.mxu0 %v950
    %v1022 = vpop.f32.mrf.mxu0
    %v1023 = vadd.f32 %v414, %v1022
    %v1024 = vpop.f32.mrf.mxu0
    %1025 = vdwg.mxu0
    %v1026 = vsel %vm495, %v1023, -inf
    %1027 = vmax.xlane.f32.xlu0 %v1026
    %v1028 = vpop.xlane.xlu0 %1027
    %v1029 = vsub.f32 %v1023, %v1028
    %v1030 = vmul.f32 %v1029, 1.442695
    %v1031 = vpow.pop %v1030
    %v1032 = vsel %vm495, %v1031, 0.0
    %1033 = vadd.xlane.f32.xlu0 %v1032
    %v1034 = vpop.xlane.xlu0 %1033
    %v1035 = vrcp.pop %v1034
    %v1036 = vmul.f32 %v1031, %v1035
    %1037 = vrot.lane.b32.xlu0 %v397, 104
    %v1038 = vpop.permute.xlu0 %1037
    %1039 = vrot.lane.b32.xlu0 %v402, 104
    %v1040 = vpop.permute.xlu0 %1039
    %v1043 = vsel %vm495, %v1036, 0
    %v1045 = vsel %vm510, %v1040, 0
    %1047 = vmatprep.subr.mxu0 0.0
    %1048 = vmatpush1.msra.mxu0 0.0
    %1049 = vmatprep.subr.mxu0 0.0
    %1050 = vmatpush1.msra.mxu0 0.0
    %1051 = vmatprep.subr.mxu0 0.0
    %1052 = vmatpush1.msra.mxu0 0.0
    %1053 = vmatprep.subr.mxu0 0.0
    %1054 = vmatpush1.msra.mxu0 0.0
    %1055 = vmatprep.subr.mxu0 0.0
    %1056 = vmatpush1.msra.mxu0 0.0
    %1057 = vmatprep.subr.mxu0 0.0
    %1058 = vmatpush1.msra.mxu0 0.0
    %1059 = vmatprep.subr.mxu0 0.0
    %1060 = vmatpush1.msra.mxu0 0.0
    %1061 = vmatprep.subr.mxu0 0.0
    %1062 = vmatpush1.msra.mxu0 0.0
    %1063 = vmatprep.subr.mxu0 0.0
    %1064 = vmatpush1.msra.mxu0 0.0
    %1065 = vmatprep.subr.mxu0 0.0
    %1066 = vmatpush1.msra.mxu0 0.0
    %1067 = vmatprep.subr.mxu0 0.0
    %1068 = vmatpush1.msra.mxu0 0.0
    %1069 = vmatprep.subr.mxu0 0.0
    %1070 = vmatpush1.msra.mxu0 0.0
    %1071 = vmatprep.subr.mxu0 0.0
    %1072 = vmatpush1.msra.mxu0 0.0
    %1073 = vmatprep.subr.mxu0 0.0
    %1074 = vmatpush1.msra.mxu0 0.0
    %1075 = vmatprep.subr.mxu0 0.0
    %1076 = vmatpush1.msra.mxu0 %v1045
    %1077 = vmatprep.subr.mxu0 0.0
    %1078 = vmatpush1.msra.mxu0 %v1038
    %1079 = vmatprep.subr.mxu0 0.0
    %1080 = vmatpush2.msra.mxu0 0.0
    %1081 = vmatprep.subr.mxu0 0.0
    %1082 = vmatpush2.msra.mxu0 0.0
    %1083 = vmatprep.subr.mxu0 0.0
    %1084 = vmatpush2.msra.mxu0 0.0
    %1085 = vmatprep.subr.mxu0 0.0
    %1086 = vmatpush2.msra.mxu0 0.0
    %1087 = vmatprep.subr.mxu0 0.0
    %1088 = vmatpush2.msra.mxu0 0.0
    %1089 = vmatprep.subr.mxu0 0.0
    %1090 = vmatpush2.msra.mxu0 0.0
    %1091 = vmatprep.subr.mxu0 0.0
    %1092 = vmatpush2.msra.mxu0 0.0
    %1093 = vmatprep.subr.mxu0 0.0
    %1094 = vmatpush2.msra.mxu0 0.0
    %1095 = vmatprep.subr.mxu0 0.0
    %1096 = vmatpush2.msra.mxu0 0.0
    %1097 = vmatprep.subr.mxu0 0.0
    %1098 = vmatpush2.msra.mxu0 0.0
    %1099 = vmatprep.subr.mxu0 0.0
    %1100 = vmatpush2.msra.mxu0 0.0
    %1101 = vmatprep.subr.mxu0 0.0
    %1102 = vmatpush2.msra.mxu0 0.0
    %1103 = vmatprep.subr.mxu0 0.0
    %1104 = vmatpush2.msra.mxu0 0.0
    %1105 = vmatprep.subr.mxu0 0.0
    %1106 = vmatpush2.msra.mxu0 0.0
    %1107 = vmatprep.subr.mxu0 0.0
    %1108 = vmatpush2.msra.mxu0 0.0
    %1109 = vmatprep.subr.mxu0 0.0
    %1110 = vmatpush2.msra.mxu0 0.0
    %1111 = vmatprep.mubr.f32.mxu0 0.0
    %1112 = vmatmul.mubr.f32.gmra.mxu0 %v1043
    %v1113 = vpop.f32.mrf.mxu0
    %v1114 = vadd.f32 0.0, %v1113
    %v1115 = vpop.f32.mrf.mxu0
    %1116 = vdwg.mxu0
    %1118 = vrot.lane.b32.xlu0 %v1114, 24
    %v1119 = vpop.permute.xlu0 %1118
    %vm1121 = vcmask 261312
    %1122 = vst.msk [vmem:[#allocation2] sm:$0xff] %vm1121, %v1119
    %v1123 = vlaneseq
    %v1124 = vshrl.u32 %v1123, 7
    %v1125 = vsub.s32 1, %v1124
    %v1126 = vrot.slane %v410, %v1125
    %vm1128 = vcmask 1045504
    %v1129 = vrot.slane %v311, 2
    %v1130 = vrot.slane %v316, 2
    %v1131 = vsel %vm1128, %v1129, %v1130
    %v1133 = vsel %vm415, %v213, 0
    %v1135 = vsel %vm415, %v1131, 0
    %v1137 = vsel %vm415, %v1130, 0
    %1139 = vmatprep.subr.mxu0 0.0
    %1140 = vmatpush1.xpose.msra.mxu0 0.0
    %1141 = vmatprep.subr.mxu0 0.0
    %1142 = vmatpush1.xpose.msra.mxu0 0.0
    %1143 = vmatprep.subr.mxu0 0.0
    %1144 = vmatpush1.xpose.msra.mxu0 0.0
    %1145 = vmatprep.subr.mxu0 0.0
    %1146 = vmatpush1.xpose.msra.mxu0 0.0
    %1147 = vmatprep.subr.mxu0 0.0
    %1148 = vmatpush1.xpose.msra.mxu0 0.0
    %1149 = vmatprep.subr.mxu0 0.0
    %1150 = vmatpush1.xpose.msra.mxu0 0.0
    %1151 = vmatprep.subr.mxu0 0.0
    %1152 = vmatpush1.xpose.msra.mxu0 0.0
    %1153 = vmatprep.subr.mxu0 0.0
    %1154 = vmatpush1.xpose.msra.mxu0 0.0
    %1155 = vmatprep.subr.mxu0 0.0
    %1156 = vmatpush1.xpose.msra.mxu0 0.0
    %1157 = vmatprep.subr.mxu0 0.0
    %1158 = vmatpush1.xpose.msra.mxu0 0.0
    %1159 = vmatprep.subr.mxu0 0.0
    %1160 = vmatpush1.xpose.msra.mxu0 0.0
    %1161 = vmatprep.subr.mxu0 0.0
    %1162 = vmatpush1.xpose.msra.mxu0 0.0
    %1163 = vmatprep.subr.mxu0 0.0
    %1164 = vmatpush1.xpose.msra.mxu0 0.0
    %1165 = vmatprep.subr.mxu0 0.0
    %1166 = vmatpush1.xpose.msra.mxu0 0.0
    %1167 = vmatprep.subr.mxu0 0.0
    %1168 = vmatpush1.xpose.msra.mxu0 %v1137
    %1169 = vmatprep.subr.mxu0 0.0
    %1170 = vmatpush1.xpose.msra.mxu0 %v1135
    %1171 = vmatprep.subr.mxu0 0.0
    %1172 = vmatpush2.xpose.msra.mxu0 0.0
    %1173 = vmatprep.subr.mxu0 0.0
    %1174 = vmatpush2.xpose.msra.mxu0 0.0
    %1175 = vmatprep.subr.mxu0 0.0
    %1176 = vmatpush2.xpose.msra.mxu0 0.0
    %1177 = vmatprep.subr.mxu0 0.0
    %1178 = vmatpush2.xpose.msra.mxu0 0.0
    %1179 = vmatprep.subr.mxu0 0.0
    %1180 = vmatpush2.xpose.msra.mxu0 0.0
    %1181 = vmatprep.subr.mxu0 0.0
    %1182 = vmatpush2.xpose.msra.mxu0 0.0
    %1183 = vmatprep.subr.mxu0 0.0
    %1184 = vmatpush2.xpose.msra.mxu0 0.0
    %1185 = vmatprep.subr.mxu0 0.0
    %1186 = vmatpush2.xpose.msra.mxu0 0.0
    %1187 = vmatprep.subr.mxu0 0.0
    %1188 = vmatpush2.xpose.msra.mxu0 0.0
    %1189 = vmatprep.subr.mxu0 0.0
    %1190 = vmatpush2.xpose.msra.mxu0 0.0
    %1191 = vmatprep.subr.mxu0 0.0
    %1192 = vmatpush2.xpose.msra.mxu0 0.0
    %1193 = vmatprep.subr.mxu0 0.0
    %1194 = vmatpush2.xpose.msra.mxu0 0.0
    %1195 = vmatprep.subr.mxu0 0.0
    %1196 = vmatpush2.xpose.msra.mxu0 0.0
    %1197 = vmatprep.subr.mxu0 0.0
    %1198 = vmatpush2.xpose.msra.mxu0 0.0
    %1199 = vmatprep.subr.mxu0 0.0
    %1200 = vmatpush2.xpose.msra.mxu0 0.0
    %1201 = vmatprep.subr.mxu0 0.0
    %1202 = vmatpush2.xpose.msra.mxu0 0.0
    %1203 = vmatprep.mubr.f32.mxu0 0.0
    %1204 = vmatmul.mubr.f32.gmra.mxu0 %v1133
    %v1205 = vpop.f32.mrf.mxu0
    %v1206 = vadd.f32 %v1126, %v1205
    %v1207 = vpop.f32.mrf.mxu0
    %1208 = vdwg.mxu0
    %v1209 = vsel %vm495, %v1206, -inf
    %1210 = vmax.xlane.f32.xlu0 %v1209
    %v1211 = vpop.xlane.xlu0 %1210
    %v1212 = vsub.f32 %v1206, %v1211
    %v1213 = vmul.f32 %v1212, 1.442695
    %v1214 = vpow.pop %v1213
    %v1215 = vsel %vm495, %v1214, 0.0
    %1216 = vadd.xlane.f32.xlu0 %v1215
    %v1217 = vpop.xlane.xlu0 %1216
    %v1218 = vrcp.pop %v1217
    %v1219 = vmul.f32 %v1214, %v1218
    %v1221 = vrot.slane %v402, 2
    %v1222 = vrot.slane %v407, 2
    %v1223 = vsel %vm1128, %v1221, %v1222
    %v1226 = vsel %vm495, %v1219, 0
    %v1228 = vsel %vm510, %v1222, 0
    %1230 = vmatprep.subr.mxu0 0.0
    %1231 = vmatpush1.msra.mxu0 0.0
    %1232 = vmatprep.subr.mxu0 0.0
    %1233 = vmatpush1.msra.mxu0 0.0
    %1234 = vmatprep.subr.mxu0 0.0
    %1235 = vmatpush1.msra.mxu0 0.0
    %1236 = vmatprep.subr.mxu0 0.0
    %1237 = vmatpush1.msra.mxu0 0.0
    %1238 = vmatprep.subr.mxu0 0.0
    %1239 = vmatpush1.msra.mxu0 0.0
    %1240 = vmatprep.subr.mxu0 0.0
    %1241 = vmatpush1.msra.mxu0 0.0
    %1242 = vmatprep.subr.mxu0 0.0
    %1243 = vmatpush1.msra.mxu0 0.0
    %1244 = vmatprep.subr.mxu0 0.0
    %1245 = vmatpush1.msra.mxu0 0.0
    %1246 = vmatprep.subr.mxu0 0.0
    %1247 = vmatpush1.msra.mxu0 0.0
    %1248 = vmatprep.subr.mxu0 0.0
    %1249 = vmatpush1.msra.mxu0 0.0
    %1250 = vmatprep.subr.mxu0 0.0
    %1251 = vmatpush1.msra.mxu0 0.0
    %1252 = vmatprep.subr.mxu0 0.0
    %1253 = vmatpush1.msra.mxu0 0.0
    %1254 = vmatprep.subr.mxu0 0.0
    %1255 = vmatpush1.msra.mxu0 0.0
    %1256 = vmatprep.subr.mxu0 0.0
    %1257 = vmatpush1.msra.mxu0 0.0
    %1258 = vmatprep.subr.mxu0 0.0
    %1259 = vmatpush1.msra.mxu0 %v1228
    %1260 = vmatprep.subr.mxu0 0.0
    %1261 = vmatpush1.msra.mxu0 %v1223
    %1262 = vmatprep.subr.mxu0 0.0
    %1263 = vmatpush2.msra.mxu0 0.0
    %1264 = vmatprep.subr.mxu0 0.0
    %1265 = vmatpush2.msra.mxu0 0.0
    %1266 = vmatprep.subr.mxu0 0.0
    %1267 = vmatpush2.msra.mxu0 0.0
    %1268 = vmatprep.subr.mxu0 0.0
    %1269 = vmatpush2.msra.mxu0 0.0
    %1270 = vmatprep.subr.mxu0 0.0
    %1271 = vmatpush2.msra.mxu0 0.0
    %1272 = vmatprep.subr.mxu0 0.0
    %1273 = vmatpush2.msra.mxu0 0.0
    %1274 = vmatprep.subr.mxu0 0.0
    %1275 = vmatpush2.msra.mxu0 0.0
    %1276 = vmatprep.subr.mxu0 0.0
    %1277 = vmatpush2.msra.mxu0 0.0
    %1278 = vmatprep.subr.mxu0 0.0
    %1279 = vmatpush2.msra.mxu0 0.0
    %1280 = vmatprep.subr.mxu0 0.0
    %1281 = vmatpush2.msra.mxu0 0.0
    %1282 = vmatprep.subr.mxu0 0.0
    %1283 = vmatpush2.msra.mxu0 0.0
    %1284 = vmatprep.subr.mxu0 0.0
    %1285 = vmatpush2.msra.mxu0 0.0
    %1286 = vmatprep.subr.mxu0 0.0
    %1287 = vmatpush2.msra.mxu0 0.0
    %1288 = vmatprep.subr.mxu0 0.0
    %1289 = vmatpush2.msra.mxu0 0.0
    %1290 = vmatprep.subr.mxu0 0.0
    %1291 = vmatpush2.msra.mxu0 0.0
    %1292 = vmatprep.subr.mxu0 0.0
    %1293 = vmatpush2.msra.mxu0 0.0
    %1294 = vmatprep.mubr.f32.mxu0 0.0
    %1295 = vmatmul.mubr.f32.gmra.mxu0 %v1226
    %v1296 = vpop.f32.mrf.mxu0
    %v1297 = vadd.f32 0.0, %v1296
    %v1298 = vpop.f32.mrf.mxu0
    %1299 = vdwg.mxu0
    %1300 = vst.msk [vmem:[#allocation2 + $0x8] sm:$0xff] %vm415, %v1297
    %1301 = vrot.lane.b32.xlu0 %v213, 120
    %v1302 = vpop.permute.xlu0 %1301
    %1303 = vrot.lane.b32.xlu0 %v1131, 120
    %v1304 = vpop.permute.xlu0 %1303
    %1305 = vrot.lane.b32.xlu0 %v1130, 120
    %v1306 = vpop.permute.xlu0 %1305
    %v1307 = vsel %vm415, %v1302, 0
    %v1309 = vsel %vm415, %v1304, 0
    %v1311 = vsel %vm415, %v1306, 0
    %1313 = vmatprep.subr.mxu0 0.0
    %1314 = vmatpush1.xpose.msra.mxu0 0.0
    %1315 = vmatprep.subr.mxu0 0.0
    %1316 = vmatpush1.xpose.msra.mxu0 0.0
    %1317 = vmatprep.subr.mxu0 0.0
    %1318 = vmatpush1.xpose.msra.mxu0 0.0
    %1319 = vmatprep.subr.mxu0 0.0
    %1320 = vmatpush1.xpose.msra.mxu0 0.0
    %1321 = vmatprep.subr.mxu0 0.0
    %1322 = vmatpush1.xpose.msra.mxu0 0.0
    %1323 = vmatprep.subr.mxu0 0.0
    %1324 = vmatpush1.xpose.msra.mxu0 0.0
    %1325 = vmatprep.subr.mxu0 0.0
    %1326 = vmatpush1.xpose.msra.mxu0 0.0
    %1327 = vmatprep.subr.mxu0 0.0
    %1328 = vmatpush1.xpose.msra.mxu0 0.0
    %1329 = vmatprep.subr.mxu0 0.0
    %1330 = vmatpush1.xpose.msra.mxu0 0.0
    %1331 = vmatprep.subr.mxu0 0.0
    %1332 = vmatpush1.xpose.msra.mxu0 0.0
    %1333 = vmatprep.subr.mxu0 0.0
    %1334 = vmatpush1.xpose.msra.mxu0 0.0
    %1335 = vmatprep.subr.mxu0 0.0
    %1336 = vmatpush1.xpose.msra.mxu0 0.0
    %1337 = vmatprep.subr.mxu0 0.0
    %1338 = vmatpush1.xpose.msra.mxu0 0.0
    %1339 = vmatprep.subr.mxu0 0.0
    %1340 = vmatpush1.xpose.msra.mxu0 0.0
    %1341 = vmatprep.subr.mxu0 0.0
    %1342 = vmatpush1.xpose.msra.mxu0 %v1311
    %1343 = vmatprep.subr.mxu0 0.0
    %1344 = vmatpush1.xpose.msra.mxu0 %v1309
    %1345 = vmatprep.subr.mxu0 0.0
    %1346 = vmatpush2.xpose.msra.mxu0 0.0
    %1347 = vmatprep.subr.mxu0 0.0
    %1348 = vmatpush2.xpose.msra.mxu0 0.0
    %1349 = vmatprep.subr.mxu0 0.0
    %1350 = vmatpush2.xpose.msra.mxu0 0.0
    %1351 = vmatprep.subr.mxu0 0.0
    %1352 = vmatpush2.xpose.msra.mxu0 0.0
    %1353 = vmatprep.subr.mxu0 0.0
    %1354 = vmatpush2.xpose.msra.mxu0 0.0
    %1355 = vmatprep.subr.mxu0 0.0
    %1356 = vmatpush2.xpose.msra.mxu0 0.0
    %1357 = vmatprep.subr.mxu0 0.0
    %1358 = vmatpush2.xpose.msra.mxu0 0.0
    %1359 = vmatprep.subr.mxu0 0.0
    %1360 = vmatpush2.xpose.msra.mxu0 0.0
    %1361 = vmatprep.subr.mxu0 0.0
    %1362 = vmatpush2.xpose.msra.mxu0 0.0
    %1363 = vmatprep.subr.mxu0 0.0
    %1364 = vmatpush2.xpose.msra.mxu0 0.0
    %1365 = vmatprep.subr.mxu0 0.0
    %1366 = vmatpush2.xpose.msra.mxu0 0.0
    %1367 = vmatprep.subr.mxu0 0.0
    %1368 = vmatpush2.xpose.msra.mxu0 0.0
    %1369 = vmatprep.subr.mxu0 0.0
    %1370 = vmatpush2.xpose.msra.mxu0 0.0
    %1371 = vmatprep.subr.mxu0 0.0
    %1372 = vmatpush2.xpose.msra.mxu0 0.0
    %1373 = vmatprep.subr.mxu0 0.0
    %1374 = vmatpush2.xpose.msra.mxu0 0.0
    %1375 = vmatprep.subr.mxu0 0.0
    %1376 = vmatpush2.xpose.msra.mxu0 0.0
    %1377 = vmatprep.mubr.f32.mxu0 0.0
    %1378 = vmatmul.mubr.f32.gmra.mxu0 %v1307
    %v1379 = vpop.f32.mrf.mxu0
    %v1380 = vadd.f32 %v1126, %v1379
    %v1381 = vpop.f32.mrf.mxu0
    %1382 = vdwg.mxu0
    %v1383 = vsel %vm495, %v1380, -inf
    %1384 = vmax.xlane.f32.xlu0 %v1383
    %v1385 = vpop.xlane.xlu0 %1384
    %v1386 = vsub.f32 %v1380, %v1385
    %v1387 = vmul.f32 %v1386, 1.442695
    %v1388 = vpow.pop %v1387
    %v1389 = vsel %vm495, %v1388, 0.0
    %1390 = vadd.xlane.f32.xlu0 %v1389
    %v1391 = vpop.xlane.xlu0 %1390
    %v1392 = vrcp.pop %v1391
    %v1393 = vmul.f32 %v1388, %v1392
    %1394 = vrot.lane.b32.xlu0 %v1223, 120
    %v1395 = vpop.permute.xlu0 %1394
    %1396 = vrot.lane.b32.xlu0 %v1222, 120
    %v1397 = vpop.permute.xlu0 %1396
    %v1400 = vsel %vm495, %v1393, 0
    %v1402 = vsel %vm510, %v1397, 0
    %1404 = vmatprep.subr.mxu0 0.0
    %1405 = vmatpush1.msra.mxu0 0.0
    %1406 = vmatprep.subr.mxu0 0.0
    %1407 = vmatpush1.msra.mxu0 0.0
    %1408 = vmatprep.subr.mxu0 0.0
    %1409 = vmatpush1.msra.mxu0 0.0
    %1410 = vmatprep.subr.mxu0 0.0
    %1411 = vmatpush1.msra.mxu0 0.0
    %1412 = vmatprep.subr.mxu0 0.0
    %1413 = vmatpush1.msra.mxu0 0.0
    %1414 = vmatprep.subr.mxu0 0.0
    %1415 = vmatpush1.msra.mxu0 0.0
    %1416 = vmatprep.subr.mxu0 0.0
    %1417 = vmatpush1.msra.mxu0 0.0
    %1418 = vmatprep.subr.mxu0 0.0
    %1419 = vmatpush1.msra.mxu0 0.0
    %1420 = vmatprep.subr.mxu0 0.0
    %1421 = vmatpush1.msra.mxu0 0.0
    %1422 = vmatprep.subr.mxu0 0.0
    %1423 = vmatpush1.msra.mxu0 0.0
    %1424 = vmatprep.subr.mxu0 0.0
    %1425 = vmatpush1.msra.mxu0 0.0
    %1426 = vmatprep.subr.mxu0 0.0
    %1427 = vmatpush1.msra.mxu0 0.0
    %1428 = vmatprep.subr.mxu0 0.0
    %1429 = vmatpush1.msra.mxu0 0.0
    %1430 = vmatprep.subr.mxu0 0.0
    %1431 = vmatpush1.msra.mxu0 0.0
    %1432 = vmatprep.subr.mxu0 0.0
    %1433 = vmatpush1.msra.mxu0 %v1402
    %1434 = vmatprep.subr.mxu0 0.0
    %1435 = vmatpush1.msra.mxu0 %v1395
    %1436 = vmatprep.subr.mxu0 0.0
    %1437 = vmatpush2.msra.mxu0 0.0
    %1438 = vmatprep.subr.mxu0 0.0
    %1439 = vmatpush2.msra.mxu0 0.0
    %1440 = vmatprep.subr.mxu0 0.0
    %1441 = vmatpush2.msra.mxu0 0.0
    %1442 = vmatprep.subr.mxu0 0.0
    %1443 = vmatpush2.msra.mxu0 0.0
    %1444 = vmatprep.subr.mxu0 0.0
    %1445 = vmatpush2.msra.mxu0 0.0
    %1446 = vmatprep.subr.mxu0 0.0
    %1447 = vmatpush2.msra.mxu0 0.0
    %1448 = vmatprep.subr.mxu0 0.0
    %1449 = vmatpush2.msra.mxu0 0.0
    %1450 = vmatprep.subr.mxu0 0.0
    %1451 = vmatpush2.msra.mxu0 0.0
    %1452 = vmatprep.subr.mxu0 0.0
    %1453 = vmatpush2.msra.mxu0 0.0
    %1454 = vmatprep.subr.mxu0 0.0
    %1455 = vmatpush2.msra.mxu0 0.0
    %1456 = vmatprep.subr.mxu0 0.0
    %1457 = vmatpush2.msra.mxu0 0.0
    %1458 = vmatprep.subr.mxu0 0.0
    %1459 = vmatpush2.msra.mxu0 0.0
    %1460 = vmatprep.subr.mxu0 0.0
    %1461 = vmatpush2.msra.mxu0 0.0
    %1462 = vmatprep.subr.mxu0 0.0
    %1463 = vmatpush2.msra.mxu0 0.0
    %1464 = vmatprep.subr.mxu0 0.0
    %1465 = vmatpush2.msra.mxu0 0.0
    %1466 = vmatprep.subr.mxu0 0.0
    %1467 = vmatpush2.msra.mxu0 0.0
    %1468 = vmatprep.mubr.f32.mxu0 0.0
    %1469 = vmatmul.mubr.f32.gmra.mxu0 %v1400
    %v1470 = vpop.f32.mrf.mxu0
    %v1471 = vadd.f32 0.0, %v1470
    %v1472 = vpop.f32.mrf.mxu0
    %1473 = vdwg.mxu0
    %1475 = vrot.lane.b32.xlu0 %v1471, 8
    %v1476 = vpop.permute.xlu0 %1475
    %1478 = vst.msk [vmem:[#allocation2 + $0x8] sm:$0xff] %vm763, %v1476
    %1479 = vrot.lane.b32.xlu0 %v213, 112
    %v1480 = vpop.permute.xlu0 %1479
    %1481 = vrot.lane.b32.xlu0 %v1131, 112
    %v1482 = vpop.permute.xlu0 %1481
    %1483 = vrot.lane.b32.xlu0 %v1130, 112
    %v1484 = vpop.permute.xlu0 %1483
    %v1485 = vsel %vm415, %v1480, 0
    %v1487 = vsel %vm415, %v1482, 0
    %v1489 = vsel %vm415, %v1484, 0
    %1491 = vmatprep.subr.mxu0 0.0
    %1492 = vmatpush1.xpose.msra.mxu0 0.0
    %1493 = vmatprep.subr.mxu0 0.0
    %1494 = vmatpush1.xpose.msra.mxu0 0.0
    %1495 = vmatprep.subr.mxu0 0.0
    %1496 = vmatpush1.xpose.msra.mxu0 0.0
    %1497 = vmatprep.subr.mxu0 0.0
    %1498 = vmatpush1.xpose.msra.mxu0 0.0
    %1499 = vmatprep.subr.mxu0 0.0
    %1500 = vmatpush1.xpose.msra.mxu0 0.0
    %1501 = vmatprep.subr.mxu0 0.0
    %1502 = vmatpush1.xpose.msra.mxu0 0.0
    %1503 = vmatprep.subr.mxu0 0.0
    %1504 = vmatpush1.xpose.msra.mxu0 0.0
    %1505 = vmatprep.subr.mxu0 0.0
    %1506 = vmatpush1.xpose.msra.mxu0 0.0
    %1507 = vmatprep.subr.mxu0 0.0
    %1508 = vmatpush1.xpose.msra.mxu0 0.0
    %1509 = vmatprep.subr.mxu0 0.0
    %1510 = vmatpush1.xpose.msra.mxu0 0.0
    %1511 = vmatprep.subr.mxu0 0.0
    %1512 = vmatpush1.xpose.msra.mxu0 0.0
    %1513 = vmatprep.subr.mxu0 0.0
    %1514 = vmatpush1.xpose.msra.mxu0 0.0
    %1515 = vmatprep.subr.mxu0 0.0
    %1516 = vmatpush1.xpose.msra.mxu0 0.0
    %1517 = vmatprep.subr.mxu0 0.0
    %1518 = vmatpush1.xpose.msra.mxu0 0.0
    %1519 = vmatprep.subr.mxu0 0.0
    %1520 = vmatpush1.xpose.msra.mxu0 %v1489
    %1521 = vmatprep.subr.mxu0 0.0
    %1522 = vmatpush1.xpose.msra.mxu0 %v1487
    %1523 = vmatprep.subr.mxu0 0.0
    %1524 = vmatpush2.xpose.msra.mxu0 0.0
    %1525 = vmatprep.subr.mxu0 0.0
    %1526 = vmatpush2.xpose.msra.mxu0 0.0
    %1527 = vmatprep.subr.mxu0 0.0
    %1528 = vmatpush2.xpose.msra.mxu0 0.0
    %1529 = vmatprep.subr.mxu0 0.0
    %1530 = vmatpush2.xpose.msra.mxu0 0.0
    %1531 = vmatprep.subr.mxu0 0.0
    %1532 = vmatpush2.xpose.msra.mxu0 0.0
    %1533 = vmatprep.subr.mxu0 0.0
    %1534 = vmatpush2.xpose.msra.mxu0 0.0
    %1535 = vmatprep.subr.mxu0 0.0
    %1536 = vmatpush2.xpose.msra.mxu0 0.0
    %1537 = vmatprep.subr.mxu0 0.0
    %1538 = vmatpush2.xpose.msra.mxu0 0.0
    %1539 = vmatprep.subr.mxu0 0.0
    %1540 = vmatpush2.xpose.msra.mxu0 0.0
    %1541 = vmatprep.subr.mxu0 0.0
    %1542 = vmatpush2.xpose.msra.mxu0 0.0
    %1543 = vmatprep.subr.mxu0 0.0
    %1544 = vmatpush2.xpose.msra.mxu0 0.0
    %1545 = vmatprep.subr.mxu0 0.0
    %1546 = vmatpush2.xpose.msra.mxu0 0.0
    %1547 = vmatprep.subr.mxu0 0.0
    %1548 = vmatpush2.xpose.msra.mxu0 0.0
    %1549 = vmatprep.subr.mxu0 0.0
    %1550 = vmatpush2.xpose.msra.mxu0 0.0
    %1551 = vmatprep.subr.mxu0 0.0
    %1552 = vmatpush2.xpose.msra.mxu0 0.0
    %1553 = vmatprep.subr.mxu0 0.0
    %1554 = vmatpush2.xpose.msra.mxu0 0.0
    %1555 = vmatprep.mubr.f32.mxu0 0.0
    %1556 = vmatmul.mubr.f32.gmra.mxu0 %v1485
    %v1557 = vpop.f32.mrf.mxu0
    %v1558 = vadd.f32 %v1126, %v1557
    %v1559 = vpop.f32.mrf.mxu0
    %1560 = vdwg.mxu0
    %v1561 = vsel %vm495, %v1558, -inf
    %1562 = vmax.xlane.f32.xlu0 %v1561
    %v1563 = vpop.xlane.xlu0 %1562
    %v1564 = vsub.f32 %v1558, %v1563
    %v1565 = vmul.f32 %v1564, 1.442695
    %v1566 = vpow.pop %v1565
    %v1567 = vsel %vm495, %v1566, 0.0
    %1568 = vadd.xlane.f32.xlu0 %v1567
    %v1569 = vpop.xlane.xlu0 %1568
    %v1570 = vrcp.pop %v1569
    %v1571 = vmul.f32 %v1566, %v1570
    %1572 = vrot.lane.b32.xlu0 %v1223, 112
    %v1573 = vpop.permute.xlu0 %1572
    %1574 = vrot.lane.b32.xlu0 %v1222, 112
    %v1575 = vpop.permute.xlu0 %1574
    %v1578 = vsel %vm495, %v1571, 0
    %v1580 = vsel %vm510, %v1575, 0
    %1582 = vmatprep.subr.mxu0 0.0
    %1583 = vmatpush1.msra.mxu0 0.0
    %1584 = vmatprep.subr.mxu0 0.0
    %1585 = vmatpush1.msra.mxu0 0.0
    %1586 = vmatprep.subr.mxu0 0.0
    %1587 = vmatpush1.msra.mxu0 0.0
    %1588 = vmatprep.subr.mxu0 0.0
    %1589 = vmatpush1.msra.mxu0 0.0
    %1590 = vmatprep.subr.mxu0 0.0
    %1591 = vmatpush1.msra.mxu0 0.0
    %1592 = vmatprep.subr.mxu0 0.0
    %1593 = vmatpush1.msra.mxu0 0.0
    %1594 = vmatprep.subr.mxu0 0.0
    %1595 = vmatpush1.msra.mxu0 0.0
    %1596 = vmatprep.subr.mxu0 0.0
    %1597 = vmatpush1.msra.mxu0 0.0
    %1598 = vmatprep.subr.mxu0 0.0
    %1599 = vmatpush1.msra.mxu0 0.0
    %1600 = vmatprep.subr.mxu0 0.0
    %1601 = vmatpush1.msra.mxu0 0.0
    %1602 = vmatprep.subr.mxu0 0.0
    %1603 = vmatpush1.msra.mxu0 0.0
    %1604 = vmatprep.subr.mxu0 0.0
    %1605 = vmatpush1.msra.mxu0 0.0
    %1606 = vmatprep.subr.mxu0 0.0
    %1607 = vmatpush1.msra.mxu0 0.0
    %1608 = vmatprep.subr.mxu0 0.0
    %1609 = vmatpush1.msra.mxu0 0.0
    %1610 = vmatprep.subr.mxu0 0.0
    %1611 = vmatpush1.msra.mxu0 %v1580
    %1612 = vmatprep.subr.mxu0 0.0
    %1613 = vmatpush1.msra.mxu0 %v1573
    %1614 = vmatprep.subr.mxu0 0.0
    %1615 = vmatpush2.msra.mxu0 0.0
    %1616 = vmatprep.subr.mxu0 0.0
    %1617 = vmatpush2.msra.mxu0 0.0
    %1618 = vmatprep.subr.mxu0 0.0
    %1619 = vmatpush2.msra.mxu0 0.0
    %1620 = vmatprep.subr.mxu0 0.0
    %1621 = vmatpush2.msra.mxu0 0.0
    %1622 = vmatprep.subr.mxu0 0.0
    %1623 = vmatpush2.msra.mxu0 0.0
    %1624 = vmatprep.subr.mxu0 0.0
    %1625 = vmatpush2.msra.mxu0 0.0
    %1626 = vmatprep.subr.mxu0 0.0
    %1627 = vmatpush2.msra.mxu0 0.0
    %1628 = vmatprep.subr.mxu0 0.0
    %1629 = vmatpush2.msra.mxu0 0.0
    %1630 = vmatprep.subr.mxu0 0.0
    %1631 = vmatpush2.msra.mxu0 0.0
    %1632 = vmatprep.subr.mxu0 0.0
    %1633 = vmatpush2.msra.mxu0 0.0
    %1634 = vmatprep.subr.mxu0 0.0
    %1635 = vmatpush2.msra.mxu0 0.0
    %1636 = vmatprep.subr.mxu0 0.0
    %1637 = vmatpush2.msra.mxu0 0.0
    %1638 = vmatprep.subr.mxu0 0.0
    %1639 = vmatpush2.msra.mxu0 0.0
    %1640 = vmatprep.subr.mxu0 0.0
    %1641 = vmatpush2.msra.mxu0 0.0
    %1642 = vmatprep.subr.mxu0 0.0
    %1643 = vmatpush2.msra.mxu0 0.0
    %1644 = vmatprep.subr.mxu0 0.0
    %1645 = vmatpush2.msra.mxu0 0.0
    %1646 = vmatprep.mubr.f32.mxu0 0.0
    %1647 = vmatmul.mubr.f32.gmra.mxu0 %v1578
    %v1648 = vpop.f32.mrf.mxu0
    %v1649 = vadd.f32 0.0, %v1648
    %v1650 = vpop.f32.mrf.mxu0
    %1651 = vdwg.mxu0
    %1653 = vrot.lane.b32.xlu0 %v1649, 16
    %v1654 = vpop.permute.xlu0 %1653
    %1656 = vst.msk [vmem:[#allocation2 + $0x8] sm:$0xff] %vm942, %v1654
    %1657 = vrot.lane.b32.xlu0 %v213, 104
    %v1658 = vpop.permute.xlu0 %1657
    %1659 = vrot.lane.b32.xlu0 %v1131, 104
    %v1660 = vpop.permute.xlu0 %1659
    %1661 = vrot.lane.b32.xlu0 %v1130, 104
    %v1662 = vpop.permute.xlu0 %1661
    %v1663 = vsel %vm415, %v1658, 0
    %v1665 = vsel %vm415, %v1660, 0
    %v1667 = vsel %vm415, %v1662, 0
    %1669 = vmatprep.subr.mxu0 0.0
    %1670 = vmatpush1.xpose.msra.mxu0 0.0
    %1671 = vmatprep.subr.mxu0 0.0
    %1672 = vmatpush1.xpose.msra.mxu0 0.0
    %1673 = vmatprep.subr.mxu0 0.0
    %1674 = vmatpush1.xpose.msra.mxu0 0.0
    %1675 = vmatprep.subr.mxu0 0.0
    %1676 = vmatpush1.xpose.msra.mxu0 0.0
    %1677 = vmatprep.subr.mxu0 0.0
    %1678 = vmatpush1.xpose.msra.mxu0 0.0
    %1679 = vmatprep.subr.mxu0 0.0
    %1680 = vmatpush1.xpose.msra.mxu0 0.0
    %1681 = vmatprep.subr.mxu0 0.0
    %1682 = vmatpush1.xpose.msra.mxu0 0.0
    %1683 = vmatprep.subr.mxu0 0.0
    %1684 = vmatpush1.xpose.msra.mxu0 0.0
    %1685 = vmatprep.subr.mxu0 0.0
    %1686 = vmatpush1.xpose.msra.mxu0 0.0
    %1687 = vmatprep.subr.mxu0 0.0
    %1688 = vmatpush1.xpose.msra.mxu0 0.0
    %1689 = vmatprep.subr.mxu0 0.0
    %1690 = vmatpush1.xpose.msra.mxu0 0.0
    %1691 = vmatprep.subr.mxu0 0.0
    %1692 = vmatpush1.xpose.msra.mxu0 0.0
    %1693 = vmatprep.subr.mxu0 0.0
    %1694 = vmatpush1.xpose.msra.mxu0 0.0
    %1695 = vmatprep.subr.mxu0 0.0
    %1696 = vmatpush1.xpose.msra.mxu0 0.0
    %1697 = vmatprep.subr.mxu0 0.0
    %1698 = vmatpush1.xpose.msra.mxu0 %v1667
    %1699 = vmatprep.subr.mxu0 0.0
    %1700 = vmatpush1.xpose.msra.mxu0 %v1665
    %1701 = vmatprep.subr.mxu0 0.0
    %1702 = vmatpush2.xpose.msra.mxu0 0.0
    %1703 = vmatprep.subr.mxu0 0.0
    %1704 = vmatpush2.xpose.msra.mxu0 0.0
    %1705 = vmatprep.subr.mxu0 0.0
    %1706 = vmatpush2.xpose.msra.mxu0 0.0
    %1707 = vmatprep.subr.mxu0 0.0
    %1708 = vmatpush2.xpose.msra.mxu0 0.0
    %1709 = vmatprep.subr.mxu0 0.0
    %1710 = vmatpush2.xpose.msra.mxu0 0.0
    %1711 = vmatprep.subr.mxu0 0.0
    %1712 = vmatpush2.xpose.msra.mxu0 0.0
    %1713 = vmatprep.subr.mxu0 0.0
    %1714 = vmatpush2.xpose.msra.mxu0 0.0
    %1715 = vmatprep.subr.mxu0 0.0
    %1716 = vmatpush2.xpose.msra.mxu0 0.0
    %1717 = vmatprep.subr.mxu0 0.0
    %1718 = vmatpush2.xpose.msra.mxu0 0.0
    %1719 = vmatprep.subr.mxu0 0.0
    %1720 = vmatpush2.xpose.msra.mxu0 0.0
    %1721 = vmatprep.subr.mxu0 0.0
    %1722 = vmatpush2.xpose.msra.mxu0 0.0
    %1723 = vmatprep.subr.mxu0 0.0
    %1724 = vmatpush2.xpose.msra.mxu0 0.0
    %1725 = vmatprep.subr.mxu0 0.0
    %1726 = vmatpush2.xpose.msra.mxu0 0.0
    %1727 = vmatprep.subr.mxu0 0.0
    %1728 = vmatpush2.xpose.msra.mxu0 0.0
    %1729 = vmatprep.subr.mxu0 0.0
    %1730 = vmatpush2.xpose.msra.mxu0 0.0
    %1731 = vmatprep.subr.mxu0 0.0
    %1732 = vmatpush2.xpose.msra.mxu0 0.0
    %1733 = vmatprep.mubr.f32.mxu0 0.0
    %1734 = vmatmul.mubr.f32.gmra.mxu0 %v1663
    %v1735 = vpop.f32.mrf.mxu0
    %v1736 = vadd.f32 %v1126, %v1735
    %v1737 = vpop.f32.mrf.mxu0
    %1738 = vdwg.mxu0
    %v1739 = vsel %vm495, %v1736, -inf
    %1740 = vmax.xlane.f32.xlu0 %v1739
    %v1741 = vpop.xlane.xlu0 %1740
    %v1742 = vsub.f32 %v1736, %v1741
    %v1743 = vmul.f32 %v1742, 1.442695
    %v1744 = vpow.pop %v1743
    %v1745 = vsel %vm495, %v1744, 0.0
    %1746 = vadd.xlane.f32.xlu0 %v1745
    %v1747 = vpop.xlane.xlu0 %1746
    %v1748 = vrcp.pop %v1747
    %v1749 = vmul.f32 %v1744, %v1748
    %1750 = vrot.lane.b32.xlu0 %v1223, 104
    %v1751 = vpop.permute.xlu0 %1750
    %1752 = vrot.lane.b32.xlu0 %v1222, 104
    %v1753 = vpop.permute.xlu0 %1752
    %v1756 = vsel %vm495, %v1749, 0
    %v1758 = vsel %vm510, %v1753, 0
    %1760 = vmatprep.subr.mxu0 0.0
    %1761 = vmatpush1.msra.mxu0 0.0
    %1762 = vmatprep.subr.mxu0 0.0
    %1763 = vmatpush1.msra.mxu0 0.0
    %1764 = vmatprep.subr.mxu0 0.0
    %1765 = vmatpush1.msra.mxu0 0.0
    %1766 = vmatprep.subr.mxu0 0.0
    %1767 = vmatpush1.msra.mxu0 0.0
    %1768 = vmatprep.subr.mxu0 0.0
    %1769 = vmatpush1.msra.mxu0 0.0
    %1770 = vmatprep.subr.mxu0 0.0
    %1771 = vmatpush1.msra.mxu0 0.0
    %1772 = vmatprep.subr.mxu0 0.0
    %1773 = vmatpush1.msra.mxu0 0.0
    %1774 = vmatprep.subr.mxu0 0.0
    %1775 = vmatpush1.msra.mxu0 0.0
    %1776 = vmatprep.subr.mxu0 0.0
    %1777 = vmatpush1.msra.mxu0 0.0
    %1778 = vmatprep.subr.mxu0 0.0
    %1779 = vmatpush1.msra.mxu0 0.0
    %1780 = vmatprep.subr.mxu0 0.0
    %1781 = vmatpush1.msra.mxu0 0.0
    %1782 = vmatprep.subr.mxu0 0.0
    %1783 = vmatpush1.msra.mxu0 0.0
    %1784 = vmatprep.subr.mxu0 0.0
    %1785 = vmatpush1.msra.mxu0 0.0
    %1786 = vmatprep.subr.mxu0 0.0
    %1787 = vmatpush1.msra.mxu0 0.0
    %1788 = vmatprep.subr.mxu0 0.0
    %1789 = vmatpush1.msra.mxu0 %v1758
    %1790 = vmatprep.subr.mxu0 0.0
    %1791 = vmatpush1.msra.mxu0 %v1751
    %1792 = vmatprep.subr.mxu0 0.0
    %1793 = vmatpush2.msra.mxu0 0.0
    %1794 = vmatprep.subr.mxu0 0.0
    %1795 = vmatpush2.msra.mxu0 0.0
    %1796 = vmatprep.subr.mxu0 0.0
    %1797 = vmatpush2.msra.mxu0 0.0
    %1798 = vmatprep.subr.mxu0 0.0
    %1799 = vmatpush2.msra.mxu0 0.0
    %1800 = vmatprep.subr.mxu0 0.0
    %1801 = vmatpush2.msra.mxu0 0.0
    %1802 = vmatprep.subr.mxu0 0.0
    %1803 = vmatpush2.msra.mxu0 0.0
    %1804 = vmatprep.subr.mxu0 0.0
    %1805 = vmatpush2.msra.mxu0 0.0
    %1806 = vmatprep.subr.mxu0 0.0
    %1807 = vmatpush2.msra.mxu0 0.0
    %1808 = vmatprep.subr.mxu0 0.0
    %1809 = vmatpush2.msra.mxu0 0.0
    %1810 = vmatprep.subr.mxu0 0.0
    %1811 = vmatpush2.msra.mxu0 0.0
    %1812 = vmatprep.subr.mxu0 0.0
    %1813 = vmatpush2.msra.mxu0 0.0
    %1814 = vmatprep.subr.mxu0 0.0
    %1815 = vmatpush2.msra.mxu0 0.0
    %1816 = vmatprep.subr.mxu0 0.0
    %1817 = vmatpush2.msra.mxu0 0.0
    %1818 = vmatprep.subr.mxu0 0.0
    %1819 = vmatpush2.msra.mxu0 0.0
    %1820 = vmatprep.subr.mxu0 0.0
    %1821 = vmatpush2.msra.mxu0 0.0
    %1822 = vmatprep.subr.mxu0 0.0
    %1823 = vmatpush2.msra.mxu0 0.0
    %1824 = vmatprep.mubr.f32.mxu0 0.0
    %1825 = vmatmul.mubr.f32.gmra.mxu0 %v1756
    %v1826 = vpop.f32.mrf.mxu0
    %v1827 = vadd.f32 0.0, %v1826
    %v1828 = vpop.f32.mrf.mxu0
    %1829 = vdwg.mxu0
    %1831 = vrot.lane.b32.xlu0 %v1827, 24
    %v1832 = vpop.permute.xlu0 %1831
    %1834 = vst.msk [vmem:[#allocation2 + $0x8] sm:$0xff] %vm1121, %v1832
    %v1835 = vld [vmem:[#allocation2] sm:$0xff]
    %v1836 = vld [vmem:[#allocation2 + $0x8] sm:$0xff]
    %v1837 = vld [vmem:[#allocation12] sm:$0xff]
    %v1838 = vld [vmem:[#allocation12 + $0x8] sm:$0xff]
    %v1839 = vld [vmem:[#allocation12 + $0x10] sm:$0xff]
    %v1840 = vld [vmem:[#allocation12 + $0x18] sm:$0xff]
    %v1841 = vld [vmem:[%s10] sm:$0x1]
    %v1843 = vlaneseq
    %v1844 = vshrl.u32 %v1843, 7
    %v1845 = vsub.s32 0, %v1844
    %v1846 = vrot.slane %v1841, %v1845
    %v1849 = vsel %vm134, %v1835, 0
    %v1852 = vsel %vm134, %v1836, 0
    %1854 = vmatprep.subr.mxu0 0.0
    %1855 = vmatpush1.msra.mxu0 0.0
    %1856 = vmatprep.subr.mxu0 0.0
    %1857 = vmatpush1.msra.mxu0 0.0
    %1858 = vmatprep.subr.mxu0 0.0
    %1859 = vmatpush1.msra.mxu0 0.0
    %1860 = vmatprep.subr.mxu0 0.0
    %1861 = vmatpush1.msra.mxu0 0.0
    %1862 = vmatprep.subr.mxu0 0.0
    %1863 = vmatpush1.msra.mxu0 0.0
    %1864 = vmatprep.subr.mxu0 0.0
    %1865 = vmatpush1.msra.mxu0 0.0
    %1866 = vmatprep.subr.mxu0 0.0
    %1867 = vmatpush1.msra.mxu0 0.0
    %1868 = vmatprep.subr.mxu0 0.0
    %1869 = vmatpush1.msra.mxu0 0.0
    %1870 = vmatprep.subr.mxu0 0.0
    %1871 = vmatpush1.msra.mxu0 0.0
    %1872 = vmatprep.subr.mxu0 0.0
    %1873 = vmatpush1.msra.mxu0 0.0
    %1874 = vmatprep.subr.mxu0 0.0
    %1875 = vmatpush1.msra.mxu0 0.0
    %1876 = vmatprep.subr.mxu0 0.0
    %1877 = vmatpush1.msra.mxu0 0.0
    %1878 = vmatprep.subr.mxu0 0.0
    %1879 = vmatpush1.msra.mxu0 %v1840
    %1880 = vmatprep.subr.mxu0 0.0
    %1881 = vmatpush1.msra.mxu0 %v1839
    %1882 = vmatprep.subr.mxu0 0.0
    %1883 = vmatpush1.msra.mxu0 %v1838
    %1884 = vmatprep.subr.mxu0 0.0
    %1885 = vmatpush1.msra.mxu0 %v1837
    %1886 = vmatprep.subr.mxu0 0.0
    %1887 = vmatpush2.msra.mxu0 0.0
    %1888 = vmatprep.subr.mxu0 0.0
    %1889 = vmatpush2.msra.mxu0 0.0
    %1890 = vmatprep.subr.mxu0 0.0
    %1891 = vmatpush2.msra.mxu0 0.0
    %1892 = vmatprep.subr.mxu0 0.0
    %1893 = vmatpush2.msra.mxu0 0.0
    %1894 = vmatprep.subr.mxu0 0.0
    %1895 = vmatpush2.msra.mxu0 0.0
    %1896 = vmatprep.subr.mxu0 0.0
    %1897 = vmatpush2.msra.mxu0 0.0
    %1898 = vmatprep.subr.mxu0 0.0
    %1899 = vmatpush2.msra.mxu0 0.0
    %1900 = vmatprep.subr.mxu0 0.0
    %1901 = vmatpush2.msra.mxu0 0.0
    %1902 = vmatprep.subr.mxu0 0.0
    %1903 = vmatpush2.msra.mxu0 0.0
    %1904 = vmatprep.subr.mxu0 0.0
    %1905 = vmatpush2.msra.mxu0 0.0
    %1906 = vmatprep.subr.mxu0 0.0
    %1907 = vmatpush2.msra.mxu0 0.0
    %1908 = vmatprep.subr.mxu0 0.0
    %1909 = vmatpush2.msra.mxu0 0.0
    %1910 = vmatprep.subr.mxu0 0.0
    %1911 = vmatpush2.msra.mxu0 0.0
    %1912 = vmatprep.subr.mxu0 0.0
    %1913 = vmatpush2.msra.mxu0 0.0
    %1914 = vmatprep.subr.mxu0 0.0
    %1915 = vmatpush2.msra.mxu0 0.0
    %1916 = vmatprep.subr.mxu0 0.0
    %1917 = vmatpush2.msra.mxu0 0.0
    %1918 = vmatprep.mubr.f32.mxu0 0.0
    %1919 = vmatmul.mubr.f32.gmra.mxu0 %v1849
    %v1920 = vpop.f32.mrf.mxu0
    %v1921 = vadd.f32 %v1846, %v1920
    %v1922 = vpop.f32.mrf.mxu0
    %1923 = vmatprep.mubr.f32.mxu0 0.0
    %1924 = vmatmul.mubr.f32.gmra.mxu0 %v1852
    %v1925 = vpop.f32.mrf.mxu0
    %v1926 = vadd.f32 %v1846, %v1925
    %v1927 = vpop.f32.mrf.mxu0
    %1928 = vdwg.mxu0
    %1929 = vst.msk [vmem:[#allocation14] sm:$0xff] %vm134, %v1921
    %1930 = vst.msk [vmem:[#allocation14 + $0x8] sm:$0xff] %vm134, %v1926
    // Predicated region
    $region70: #{tpu_custom_call.1} parent=1 // pred_check
      _
    $region71: #{tpu_custom_call.1} parent=1 // pred_check_branch
      %1932 = sbr.rel (0) target = $region73
    $region72: #{tpu_custom_call.1} parent=1 // pred_region
      %s1934 = ssub.s32 256, 256
      %1935 = vsyncadd [#allocation5], %s1934
      %s1936 = sshll.u32 [#allocation14], 4
      %s1937 = int_to_ptr.vmem [resolvable:$true] %s1936
      %1942 = dma.vmem_to_hbm [thread:$0]  %s1937, 256, %s11, [#allocation5], 128, 128, 8
    $region73: #{tpu_custom_call.1} parent=1 // pred_fallthru
      _
    // Predicated region
    $region74: #{tpu_custom_call.1} parent=1 // pred_check
      _
    $region75: #{tpu_custom_call.1} parent=1 // pred_check_branch
      %1944 = sbr.rel (0) target = $region77
    $region76: #{tpu_custom_call.1} parent=1 // pred_region
      %1945 = dma.done [#allocation5], 256
    $region77: #{tpu_custom_call.1} parent=1 // pred_fallthru
      _
    %1946 = vsyncpa [#allocation4], 1
    %1947 = vsyncpa [#allocation7], 1
    %1948 = vsyncpa [#allocation10], 1
    %1949 = vsyncpa [#allocation13], 1
    %1950 = vsyncpa [#allocation5], 1

</llo_original>
